<compile_context>
chip_gen: v7x
topology: tpu7x:2x2x1
jax: 0.10.0
libtpu: 0.0.40
codegen_flags: <defaults>
</compile_context>

<pallas_src>
import jax
import jax.numpy as jnp
import numpy as np
from jax.experimental import pallas as pl
from jax.experimental.pallas import tpu as pltpu


VOCAB_SIZE = 16
HIDDEN_SIZE = 32
GATE_PAD = 128          # lanes reserved per gate (r | z | n)


def encoder_gru_kernel(tokens_ref, h0_ref, e_ih_ref, w_hh_ref, b_hn_ref,
                       out_ref, h_out_ref):
    """Full-sequence GRU encoder (PyTorch nn.GRU semantics, seq-major, B=1).

    tokens_ref : SMEM int32 [T]            token ids
    h0_ref     : VMEM f32  [1, 128]        initial hidden, lanes H:128 zero
    e_ih_ref   : VMEM f32  [V, 1, 3*128]   embedding pre-projected through
                                           W_ih with r/z/n gi-biases folded in,
                                           each gate padded to 128 lanes
    w_hh_ref   : VMEM f32  [128, 3*128]    packed hidden-side weights (rows and
                                           per-gate columns zero-padded)
    b_hn_ref   : VMEM f32  [1, 128]        hidden-side n-gate bias (padded)
    out_ref    : VMEM f32  [T, H]          GRU outputs (row t == h_{t+1})
    h_out_ref  : VMEM f32  [1, H]          final hidden state
    """
    T, H = out_ref.shape
    GP = w_hh_ref.shape[1] // 3            # 128 lanes per gate

    # Parameters resident in vregs for the whole sequence (< 200 KiB VMEM).
    w_hh = w_hh_ref[...]                   # [128, 3*128]
    b_hn = b_hn_ref[...]                   # [1, 128]

    # Input-side projection hoisted out of the recurrence: one dynamic row
    # gather per token (no per-step MXU push / iota-compare on the serial
    # chain; biases for r, z and the input side of n are already folded in).
    gi_rows = [e_ih_ref[tokens_ref[t]] for t in range(T)]     # each [1, 3*128]

    h = h0_ref[...]                        # [1, 128], pad lanes exactly zero
    rows = []
    for t in range(T):                     # static T -> fully unrolled
        gi = gi_rows[t]
        gh = jnp.dot(h, w_hh, preferred_element_type=jnp.float32)  # [1, 3*128]

        # Whole-vreg gate slices (128-lane aligned).
        r = jax.nn.sigmoid(gi[:, 0:GP] + gh[:, 0:GP])
        z = jax.nn.sigmoid(gi[:, GP:2 * GP] + gh[:, GP:2 * GP])
        n = jnp.tanh(gi[:, 2 * GP:3 * GP] + r * (gh[:, 2 * GP:3 * GP] + b_hn))
        h = (1.0 - z) * n + z * h          # pad lanes stay 0: 0.5*0 + 0.5*0

        rows.append(h)

    # Single batched store of the whole output sequence + final hidden state
    # (no per-step sublane-sparse masked stores on the critical chain).
    all_h = jnp.concatenate(rows, axis=0)  # [T, 128]
    out_ref[...] = all_h[:, :H]
    h_out_ref[...] = rows[-1][:, :H]


@jax.jit
def _encoder_forward_sequence_jit(prepared, tokens, hidden):
    T = tokens.shape[0]
    H = hidden.shape[-1]

    h0 = jnp.zeros((1, GATE_PAD), jnp.float32)
    h0 = h0.at[:, :H].set(hidden.reshape(1, H).astype(jnp.float32))

    smem = pl.BlockSpec(memory_space=pltpu.MemorySpace.SMEM)
    vmem = pl.BlockSpec(memory_space=pltpu.MemorySpace.VMEM)

    out, h_new = pl.pallas_call(
        encoder_gru_kernel,
        out_shape=(jax.ShapeDtypeStruct((T, H), jnp.float32),
                   jax.ShapeDtypeStruct((1, H), jnp.float32)),
        in_specs=[smem, vmem, vmem, vmem, vmem],
        out_specs=(vmem, vmem),
    )(tokens, h0, prepared["e_ih"], prepared["w_hh"], prepared["b_hn"])

    # Trailing reshapes fuse under jit (single dispatch around the kernel).
    return out.reshape(T, 1, H), h_new.reshape(1, 1, H)


def encoder_forward_sequence(prepared, tokens, hidden):
    """Run the encoder over a whole token sequence in one pallas_call.

    tokens : int32 [T],  hidden : f32 [1, 1, H]
    Returns (output [T, 1, H], new_hidden [1, 1, H]).
    """
    tokens = jnp.asarray(tokens, dtype=jnp.int32)
    hidden = jnp.asarray(hidden, dtype=jnp.float32)
    return _encoder_forward_sequence_jit(prepared, tokens, hidden)


def encoder_forward(prepared, token, hidden):
    """Mirrors Encoder.forward exactly: one token, one step."""
    tokens = jnp.reshape(jnp.asarray(token, dtype=jnp.int32), (1,))
    return encoder_forward_sequence(prepared, tokens, hidden)


def init_encoder_params(key, vocab_size, hidden_size):
    """Deterministic synthetic parameters (PyTorch-style layouts/init).

    w_ih / w_hh are stored per-gate, pre-transposed so x @ W[g] matches
    PyTorch's W_g @ x.  Gate order is (r, z, n), matching nn.GRU.
    """
    H = hidden_size
    k_emb, k_wih, k_whh, k_bih, k_bhh = jax.random.split(key, 5)
    bound = 1.0 / np.sqrt(H)
    return {
        "embedding": jax.random.normal(k_emb, (vocab_size, H), jnp.float32),
        "w_ih": jax.random.uniform(k_wih, (3, H, H), jnp.float32, -bound, bound),
        "w_hh": jax.random.uniform(k_whh, (3, H, H), jnp.float32, -bound, bound),
        "b_ih": jax.random.uniform(k_bih, (3, 1, H), jnp.float32, -bound, bound),
        "b_hh": jax.random.uniform(k_bhh, (3, 1, H), jnp.float32, -bound, bound),
    }


def prepare_encoder_params(params, gate_pad=GATE_PAD):
    """One-time weight packing (amortized): fold embedding @ W_ih and all
    gi-additive biases into one table; pad every gate to 128 lanes."""
    emb = params["embedding"]
    V, H = emb.shape
    assert gate_pad >= H

    gi_bias = [params["b_ih"][0] + params["b_hh"][0],   # r: both sides fold
               params["b_ih"][1] + params["b_hh"][1],   # z: both sides fold
               params["b_ih"][2]]                       # n: input side only

    e_gates, hh_gates = [], []
    for g in range(3):
        eg = jnp.dot(emb, params["w_ih"][g],
                     precision=jax.lax.Precision.HIGHEST) + gi_bias[g]   # [V,H]
        e_gates.append(jnp.pad(eg, ((0, 0), (0, gate_pad - H))))          # [V,128]
        hh_gates.append(jnp.pad(params["w_hh"][g],
                                ((0, gate_pad - H), (0, gate_pad - H))))  # [128,128]

    e_ih = jnp.concatenate(e_gates, axis=-1).reshape(V, 1, 3 * gate_pad)
    w_hh = jnp.concatenate(hh_gates, axis=-1)                             # [128,384]
    b_hn = jnp.pad(params["b_hh"][2], ((0, 0), (0, gate_pad - H)))        # [1,128]

    return {"e_ih": e_ih.astype(jnp.float32),
            "w_hh": w_hh.astype(jnp.float32),
            "b_hn": b_hn.astype(jnp.float32)}


def encoder_sequence_ref(params, tokens, hidden):
    """Pure-JAX reference: the original (unpacked) Encoder step applied T times."""
    H = hidden.shape[-1]
    h = hidden.reshape(1, H)
    outs = []
    for t in range(int(tokens.shape[0])):
        x = params["embedding"][tokens[t]].reshape(1, H)
        gi = [x @ params["w_ih"][g] + params["b_ih"][g] for g in range(3)]
        gh = [h @ params["w_hh"][g] + params["b_hh"][g] for g in range(3)]
        r = jax.nn.sigmoid(gi[0] + gh[0])
        z = jax.nn.sigmoid(gi[1] + gh[1])
        n = jnp.tanh(gi[2] + r * gh[2])
        h = (1.0 - z) * n + z * h
        outs.append(h)
    return jnp.stack(outs, axis=0), h.reshape(1, 1, H)


if __name__ == "__main__":
    key = jax.random.PRNGKey(0)
    params = init_encoder_params(key, VOCAB_SIZE, HIDDEN_SIZE)
    prepared = prepare_encoder_params(params)

    SEQ_LEN = 8
    tokens = jax.random.randint(jax.random.PRNGKey(1), (SEQ_LEN,), 0, VOCAB_SIZE,
                                dtype=jnp.int32)
    hidden0 = jnp.zeros((1, 1, HIDDEN_SIZE), jnp.float32)   # init_hidden_state()
    hidden_nz = jax.random.normal(jax.random.PRNGKey(2), (1, 1, HIDDEN_SIZE),
                                  jnp.float32) * 0.1

    # Full-sequence encoder: per-token loop internalized in one pallas_call.
    out_seq, h_seq = encoder_forward_sequence(prepared, tokens, hidden0)
    out_seq = jax.block_until_ready(out_seq)
    h_seq = jax.block_until_ready(h_seq)

    out_ref, h_ref = encoder_sequence_ref(params, tokens, hidden0)
    np.testing.assert_allclose(np.asarray(out_seq), np.asarray(out_ref),
                               rtol=1e-5, atol=2e-5)
    np.testing.assert_allclose(np.asarray(h_seq), np.asarray(h_ref),
                               rtol=1e-5, atol=2e-5)

    # Single-step call, exactly mirroring Encoder.forward(batch, hidden).
    token = jnp.array(3, dtype=jnp.int32)
    out1, h1 = encoder_forward(prepared, token, hidden_nz)
    out1 = jax.block_until_ready(out1)
    h1 = jax.block_until_ready(h1)
    out1_ref, h1_ref = encoder_sequence_ref(params, jnp.reshape(token, (1,)),
                                            hidden_nz)
    np.testing.assert_allclose(np.asarray(out1), np.asarray(out1_ref),
                               rtol=1e-5, atol=2e-5)
    np.testing.assert_allclose(np.asarray(h1), np.asarray(h1_ref),
                               rtol=1e-5, atol=2e-5)

    assert out_seq.shape == (SEQ_LEN, 1, HIDDEN_SIZE)
    assert h_seq.shape == (1, 1, HIDDEN_SIZE)
    assert out1.shape == (1, 1, HIDDEN_SIZE) and h1.shape == (1, 1, HIDDEN_SIZE)
    print("KERNEL_OK")
</pallas_src>

<mosaic_0001>
module attributes {stable_mosaic.version = 11 : i64} {
  func.func @encoder_gru_kernel(%arg0: memref<8xi32, #tpu.memory_space<smem>>, %arg1: memref<1x128xf32, #tpu.memory_space<vmem>>, %arg2: memref<16x1x384xf32, #tpu.memory_space<vmem>>, %arg3: memref<128x384xf32, #tpu.memory_space<vmem>>, %arg4: memref<1x128xf32, #tpu.memory_space<vmem>>, %arg5: memref<8x32xf32, #tpu.memory_space<vmem>>, %arg6: memref<1x32xf32, #tpu.memory_space<vmem>>) attributes {dimension_semantics = [], scalar_prefetch = 0 : i64, scratch_operands = 0 : i64, tpu.core_type = #tpu.core_type<tc>} {
    %c0 = arith.constant 0 : index
    %c0_0 = arith.constant 0 : index
    %0 = vector.load %arg3[%c0, %c0_0] : memref<128x384xf32, #tpu.memory_space<vmem>>, vector<128x384xf32>
    %c0_1 = arith.constant 0 : index
    %c0_2 = arith.constant 0 : index
    %1 = vector.load %arg4[%c0_1, %c0_2] : memref<1x128xf32, #tpu.memory_space<vmem>>, vector<1x128xf32>
    %c0_3 = arith.constant 0 : index
    %2 = memref.load %arg0[%c0_3] : memref<8xi32, #tpu.memory_space<smem>>
    %3 = arith.index_cast %2 : i32 to index
    %c0_4 = arith.constant 0 : index
    %c0_5 = arith.constant 0 : index
    %4 = vector.load %arg2[%3, %c0_4, %c0_5] : memref<16x1x384xf32, #tpu.memory_space<vmem>>, vector<1x1x384xf32>
    %5 = vector.shape_cast %4 : vector<1x1x384xf32> to vector<1x384xf32>
    %c1 = arith.constant 1 : index
    %6 = memref.load %arg0[%c1] : memref<8xi32, #tpu.memory_space<smem>>
    %7 = arith.index_cast %6 : i32 to index
    %c0_6 = arith.constant 0 : index
    %c0_7 = arith.constant 0 : index
    %8 = vector.load %arg2[%7, %c0_6, %c0_7] : memref<16x1x384xf32, #tpu.memory_space<vmem>>, vector<1x1x384xf32>
    %9 = vector.shape_cast %8 : vector<1x1x384xf32> to vector<1x384xf32>
    %c2 = arith.constant 2 : index
    %10 = memref.load %arg0[%c2] : memref<8xi32, #tpu.memory_space<smem>>
    %11 = arith.index_cast %10 : i32 to index
    %c0_8 = arith.constant 0 : index
    %c0_9 = arith.constant 0 : index
    %12 = vector.load %arg2[%11, %c0_8, %c0_9] : memref<16x1x384xf32, #tpu.memory_space<vmem>>, vector<1x1x384xf32>
    %13 = vector.shape_cast %12 : vector<1x1x384xf32> to vector<1x384xf32>
    %c3 = arith.constant 3 : index
    %14 = memref.load %arg0[%c3] : memref<8xi32, #tpu.memory_space<smem>>
    %15 = arith.index_cast %14 : i32 to index
    %c0_10 = arith.constant 0 : index
    %c0_11 = arith.constant 0 : index
    %16 = vector.load %arg2[%15, %c0_10, %c0_11] : memref<16x1x384xf32, #tpu.memory_space<vmem>>, vector<1x1x384xf32>
    %17 = vector.shape_cast %16 : vector<1x1x384xf32> to vector<1x384xf32>
    %c4 = arith.constant 4 : index
    %18 = memref.load %arg0[%c4] : memref<8xi32, #tpu.memory_space<smem>>
    %19 = arith.index_cast %18 : i32 to index
    %c0_12 = arith.constant 0 : index
    %c0_13 = arith.constant 0 : index
    %20 = vector.load %arg2[%19, %c0_12, %c0_13] : memref<16x1x384xf32, #tpu.memory_space<vmem>>, vector<1x1x384xf32>
    %21 = vector.shape_cast %20 : vector<1x1x384xf32> to vector<1x384xf32>
    %c5 = arith.constant 5 : index
    %22 = memref.load %arg0[%c5] : memref<8xi32, #tpu.memory_space<smem>>
    %23 = arith.index_cast %22 : i32 to index
    %c0_14 = arith.constant 0 : index
    %c0_15 = arith.constant 0 : index
    %24 = vector.load %arg2[%23, %c0_14, %c0_15] : memref<16x1x384xf32, #tpu.memory_space<vmem>>, vector<1x1x384xf32>
    %25 = vector.shape_cast %24 : vector<1x1x384xf32> to vector<1x384xf32>
    %c6 = arith.constant 6 : index
    %26 = memref.load %arg0[%c6] : memref<8xi32, #tpu.memory_space<smem>>
    %27 = arith.index_cast %26 : i32 to index
    %c0_16 = arith.constant 0 : index
    %c0_17 = arith.constant 0 : index
    %28 = vector.load %arg2[%27, %c0_16, %c0_17] : memref<16x1x384xf32, #tpu.memory_space<vmem>>, vector<1x1x384xf32>
    %29 = vector.shape_cast %28 : vector<1x1x384xf32> to vector<1x384xf32>
    %c7 = arith.constant 7 : index
    %30 = memref.load %arg0[%c7] : memref<8xi32, #tpu.memory_space<smem>>
    %31 = arith.index_cast %30 : i32 to index
    %c0_18 = arith.constant 0 : index
    %c0_19 = arith.constant 0 : index
    %32 = vector.load %arg2[%31, %c0_18, %c0_19] : memref<16x1x384xf32, #tpu.memory_space<vmem>>, vector<1x1x384xf32>
    %33 = vector.shape_cast %32 : vector<1x1x384xf32> to vector<1x384xf32>
    %c0_20 = arith.constant 0 : index
    %c0_21 = arith.constant 0 : index
    %34 = vector.load %arg1[%c0_20, %c0_21] : memref<1x128xf32, #tpu.memory_space<vmem>>, vector<1x128xf32>
    %cst = arith.constant dense<0.000000e+00> : vector<1x384xf32>
    %35 = tpu.matmul %34, %0, %cst {dimension_numbers = #tpu.dot_dimension_numbers<[1], [0], [0], [1], [0, 0, 1, 1], [], []>} : vector<1x128xf32>, vector<128x384xf32>, vector<1x384xf32> -> vector<1x384xf32>
    %36 = vector.extract_strided_slice %5 {offsets = [0, 0], sizes = [1, 128], strides = [1, 1]} : vector<1x384xf32> to vector<1x128xf32>
    %37 = vector.extract_strided_slice %35 {offsets = [0, 0], sizes = [1, 128], strides = [1, 1]} : vector<1x384xf32> to vector<1x128xf32>
    %38 = arith.addf %36, %37 : vector<1x128xf32>
    %39 = arith.negf %38 : vector<1x128xf32>
    %40 = math.exp %39 : vector<1x128xf32>
    %cst_22 = arith.constant 1.000000e+00 : f32
    %41 = vector.broadcast %cst_22 : f32 to vector<1x128xf32>
    %42 = arith.addf %41, %40 : vector<1x128xf32>
    %43 = arith.divf %41, %42 : vector<1x128xf32>
    %44 = vector.extract_strided_slice %5 {offsets = [0, 128], sizes = [1, 128], strides = [1, 1]} : vector<1x384xf32> to vector<1x128xf32>
    %45 = vector.extract_strided_slice %35 {offsets = [0, 128], sizes = [1, 128], strides = [1, 1]} : vector<1x384xf32> to vector<1x128xf32>
    %46 = arith.addf %44, %45 : vector<1x128xf32>
    %47 = arith.negf %46 : vector<1x128xf32>
    %48 = math.exp %47 : vector<1x128xf32>
    %cst_23 = arith.constant 1.000000e+00 : f32
    %49 = vector.broadcast %cst_23 : f32 to vector<1x128xf32>
    %50 = arith.addf %49, %48 : vector<1x128xf32>
    %51 = arith.divf %49, %50 : vector<1x128xf32>
    %52 = vector.extract_strided_slice %5 {offsets = [0, 256], sizes = [1, 128], strides = [1, 1]} : vector<1x384xf32> to vector<1x128xf32>
    %53 = vector.extract_strided_slice %35 {offsets = [0, 256], sizes = [1, 128], strides = [1, 1]} : vector<1x384xf32> to vector<1x128xf32>
    %54 = arith.addf %53, %1 : vector<1x128xf32>
    %55 = arith.mulf %43, %54 : vector<1x128xf32>
    %56 = arith.addf %52, %55 : vector<1x128xf32>
    %57 = math.tanh %56 : vector<1x128xf32>
    %cst_24 = arith.constant 1.000000e+00 : f32
    %58 = vector.broadcast %cst_24 : f32 to vector<1x128xf32>
    %59 = arith.subf %58, %51 : vector<1x128xf32>
    %60 = arith.mulf %59, %57 : vector<1x128xf32>
    %61 = arith.mulf %51, %34 : vector<1x128xf32>
    %62 = arith.addf %60, %61 : vector<1x128xf32>
    %cst_25 = arith.constant dense<0.000000e+00> : vector<1x384xf32>
    %63 = tpu.matmul %62, %0, %cst_25 {dimension_numbers = #tpu.dot_dimension_numbers<[1], [0], [0], [1], [0, 0, 1, 1], [], []>} : vector<1x128xf32>, vector<128x384xf32>, vector<1x384xf32> -> vector<1x384xf32>
    %64 = vector.extract_strided_slice %9 {offsets = [0, 0], sizes = [1, 128], strides = [1, 1]} : vector<1x384xf32> to vector<1x128xf32>
    %65 = vector.extract_strided_slice %63 {offsets = [0, 0], sizes = [1, 128], strides = [1, 1]} : vector<1x384xf32> to vector<1x128xf32>
    %66 = arith.addf %64, %65 : vector<1x128xf32>
    %67 = arith.negf %66 : vector<1x128xf32>
    %68 = math.exp %67 : vector<1x128xf32>
    %cst_26 = arith.constant 1.000000e+00 : f32
    %69 = vector.broadcast %cst_26 : f32 to vector<1x128xf32>
    %70 = arith.addf %69, %68 : vector<1x128xf32>
    %71 = arith.divf %69, %70 : vector<1x128xf32>
    %72 = vector.extract_strided_slice %9 {offsets = [0, 128], sizes = [1, 128], strides = [1, 1]} : vector<1x384xf32> to vector<1x128xf32>
    %73 = vector.extract_strided_slice %63 {offsets = [0, 128], sizes = [1, 128], strides = [1, 1]} : vector<1x384xf32> to vector<1x128xf32>
    %74 = arith.addf %72, %73 : vector<1x128xf32>
    %75 = arith.negf %74 : vector<1x128xf32>
    %76 = math.exp %75 : vector<1x128xf32>
    %cst_27 = arith.constant 1.000000e+00 : f32
    %77 = vector.broadcast %cst_27 : f32 to vector<1x128xf32>
    %78 = arith.addf %77, %76 : vector<1x128xf32>
    %79 = arith.divf %77, %78 : vector<1x128xf32>
    %80 = vector.extract_strided_slice %9 {offsets = [0, 256], sizes = [1, 128], strides = [1, 1]} : vector<1x384xf32> to vector<1x128xf32>
    %81 = vector.extract_strided_slice %63 {offsets = [0, 256], sizes = [1, 128], strides = [1, 1]} : vector<1x384xf32> to vector<1x128xf32>
    %82 = arith.addf %81, %1 : vector<1x128xf32>
    %83 = arith.mulf %71, %82 : vector<1x128xf32>
    %84 = arith.addf %80, %83 : vector<1x128xf32>
    %85 = math.tanh %84 : vector<1x128xf32>
    %cst_28 = arith.constant 1.000000e+00 : f32
    %86 = vector.broadcast %cst_28 : f32 to vector<1x128xf32>
    %87 = arith.subf %86, %79 : vector<1x128xf32>
    %88 = arith.mulf %87, %85 : vector<1x128xf32>
    %89 = arith.mulf %79, %62 : vector<1x128xf32>
    %90 = arith.addf %88, %89 : vector<1x128xf32>
    %cst_29 = arith.constant dense<0.000000e+00> : vector<1x384xf32>
    %91 = tpu.matmul %90, %0, %cst_29 {dimension_numbers = #tpu.dot_dimension_numbers<[1], [0], [0], [1], [0, 0, 1, 1], [], []>} : vector<1x128xf32>, vector<128x384xf32>, vector<1x384xf32> -> vector<1x384xf32>
    %92 = vector.extract_strided_slice %13 {offsets = [0, 0], sizes = [1, 128], strides = [1, 1]} : vector<1x384xf32> to vector<1x128xf32>
    %93 = vector.extract_strided_slice %91 {offsets = [0, 0], sizes = [1, 128], strides = [1, 1]} : vector<1x384xf32> to vector<1x128xf32>
    %94 = arith.addf %92, %93 : vector<1x128xf32>
    %95 = arith.negf %94 : vector<1x128xf32>
    %96 = math.exp %95 : vector<1x128xf32>
    %cst_30 = arith.constant 1.000000e+00 : f32
    %97 = vector.broadcast %cst_30 : f32 to vector<1x128xf32>
    %98 = arith.addf %97, %96 : vector<1x128xf32>
    %99 = arith.divf %97, %98 : vector<1x128xf32>
    %100 = vector.extract_strided_slice %13 {offsets = [0, 128], sizes = [1, 128], strides = [1, 1]} : vector<1x384xf32> to vector<1x128xf32>
    %101 = vector.extract_strided_slice %91 {offsets = [0, 128], sizes = [1, 128], strides = [1, 1]} : vector<1x384xf32> to vector<1x128xf32>
    %102 = arith.addf %100, %101 : vector<1x128xf32>
    %103 = arith.negf %102 : vector<1x128xf32>
    %104 = math.exp %103 : vector<1x128xf32>
    %cst_31 = arith.constant 1.000000e+00 : f32
    %105 = vector.broadcast %cst_31 : f32 to vector<1x128xf32>
    %106 = arith.addf %105, %104 : vector<1x128xf32>
    %107 = arith.divf %105, %106 : vector<1x128xf32>
    %108 = vector.extract_strided_slice %13 {offsets = [0, 256], sizes = [1, 128], strides = [1, 1]} : vector<1x384xf32> to vector<1x128xf32>
    %109 = vector.extract_strided_slice %91 {offsets = [0, 256], sizes = [1, 128], strides = [1, 1]} : vector<1x384xf32> to vector<1x128xf32>
    %110 = arith.addf %109, %1 : vector<1x128xf32>
    %111 = arith.mulf %99, %110 : vector<1x128xf32>
    %112 = arith.addf %108, %111 : vector<1x128xf32>
    %113 = math.tanh %112 : vector<1x128xf32>
    %cst_32 = arith.constant 1.000000e+00 : f32
    %114 = vector.broadcast %cst_32 : f32 to vector<1x128xf32>
    %115 = arith.subf %114, %107 : vector<1x128xf32>
    %116 = arith.mulf %115, %113 : vector<1x128xf32>
    %117 = arith.mulf %107, %90 : vector<1x128xf32>
    %118 = arith.addf %116, %117 : vector<1x128xf32>
    %cst_33 = arith.constant dense<0.000000e+00> : vector<1x384xf32>
    %119 = tpu.matmul %118, %0, %cst_33 {dimension_numbers = #tpu.dot_dimension_numbers<[1], [0], [0], [1], [0, 0, 1, 1], [], []>} : vector<1x128xf32>, vector<128x384xf32>, vector<1x384xf32> -> vector<1x384xf32>
    %120 = vector.extract_strided_slice %17 {offsets = [0, 0], sizes = [1, 128], strides = [1, 1]} : vector<1x384xf32> to vector<1x128xf32>
    %121 = vector.extract_strided_slice %119 {offsets = [0, 0], sizes = [1, 128], strides = [1, 1]} : vector<1x384xf32> to vector<1x128xf32>
    %122 = arith.addf %120, %121 : vector<1x128xf32>
    %123 = arith.negf %122 : vector<1x128xf32>
    %124 = math.exp %123 : vector<1x128xf32>
    %cst_34 = arith.constant 1.000000e+00 : f32
    %125 = vector.broadcast %cst_34 : f32 to vector<1x128xf32>
    %126 = arith.addf %125, %124 : vector<1x128xf32>
    %127 = arith.divf %125, %126 : vector<1x128xf32>
    %128 = vector.extract_strided_slice %17 {offsets = [0, 128], sizes = [1, 128], strides = [1, 1]} : vector<1x384xf32> to vector<1x128xf32>
    %129 = vector.extract_strided_slice %119 {offsets = [0, 128], sizes = [1, 128], strides = [1, 1]} : vector<1x384xf32> to vector<1x128xf32>
    %130 = arith.addf %128, %129 : vector<1x128xf32>
    %131 = arith.negf %130 : vector<1x128xf32>
    %132 = math.exp %131 : vector<1x128xf32>
    %cst_35 = arith.constant 1.000000e+00 : f32
    %133 = vector.broadcast %cst_35 : f32 to vector<1x128xf32>
    %134 = arith.addf %133, %132 : vector<1x128xf32>
    %135 = arith.divf %133, %134 : vector<1x128xf32>
    %136 = vector.extract_strided_slice %17 {offsets = [0, 256], sizes = [1, 128], strides = [1, 1]} : vector<1x384xf32> to vector<1x128xf32>
    %137 = vector.extract_strided_slice %119 {offsets = [0, 256], sizes = [1, 128], strides = [1, 1]} : vector<1x384xf32> to vector<1x128xf32>
    %138 = arith.addf %137, %1 : vector<1x128xf32>
    %139 = arith.mulf %127, %138 : vector<1x128xf32>
    %140 = arith.addf %136, %139 : vector<1x128xf32>
    %141 = math.tanh %140 : vector<1x128xf32>
    %cst_36 = arith.constant 1.000000e+00 : f32
    %142 = vector.broadcast %cst_36 : f32 to vector<1x128xf32>
    %143 = arith.subf %142, %135 : vector<1x128xf32>
    %144 = arith.mulf %143, %141 : vector<1x128xf32>
    %145 = arith.mulf %135, %118 : vector<1x128xf32>
    %146 = arith.addf %144, %145 : vector<1x128xf32>
    %cst_37 = arith.constant dense<0.000000e+00> : vector<1x384xf32>
    %147 = tpu.matmul %146, %0, %cst_37 {dimension_numbers = #tpu.dot_dimension_numbers<[1], [0], [0], [1], [0, 0, 1, 1], [], []>} : vector<1x128xf32>, vector<128x384xf32>, vector<1x384xf32> -> vector<1x384xf32>
    %148 = vector.extract_strided_slice %21 {offsets = [0, 0], sizes = [1, 128], strides = [1, 1]} : vector<1x384xf32> to vector<1x128xf32>
    %149 = vector.extract_strided_slice %147 {offsets = [0, 0], sizes = [1, 128], strides = [1, 1]} : vector<1x384xf32> to vector<1x128xf32>
    %150 = arith.addf %148, %149 : vector<1x128xf32>
    %151 = arith.negf %150 : vector<1x128xf32>
    %152 = math.exp %151 : vector<1x128xf32>
    %cst_38 = arith.constant 1.000000e+00 : f32
    %153 = vector.broadcast %cst_38 : f32 to vector<1x128xf32>
    %154 = arith.addf %153, %152 : vector<1x128xf32>
    %155 = arith.divf %153, %154 : vector<1x128xf32>
    %156 = vector.extract_strided_slice %21 {offsets = [0, 128], sizes = [1, 128], strides = [1, 1]} : vector<1x384xf32> to vector<1x128xf32>
    %157 = vector.extract_strided_slice %147 {offsets = [0, 128], sizes = [1, 128], strides = [1, 1]} : vector<1x384xf32> to vector<1x128xf32>
    %158 = arith.addf %156, %157 : vector<1x128xf32>
    %159 = arith.negf %158 : vector<1x128xf32>
    %160 = math.exp %159 : vector<1x128xf32>
    %cst_39 = arith.constant 1.000000e+00 : f32
    %161 = vector.broadcast %cst_39 : f32 to vector<1x128xf32>
    %162 = arith.addf %161, %160 : vector<1x128xf32>
    %163 = arith.divf %161, %162 : vector<1x128xf32>
    %164 = vector.extract_strided_slice %21 {offsets = [0, 256], sizes = [1, 128], strides = [1, 1]} : vector<1x384xf32> to vector<1x128xf32>
    %165 = vector.extract_strided_slice %147 {offsets = [0, 256], sizes = [1, 128], strides = [1, 1]} : vector<1x384xf32> to vector<1x128xf32>
    %166 = arith.addf %165, %1 : vector<1x128xf32>
    %167 = arith.mulf %155, %166 : vector<1x128xf32>
    %168 = arith.addf %164, %167 : vector<1x128xf32>
    %169 = math.tanh %168 : vector<1x128xf32>
    %cst_40 = arith.constant 1.000000e+00 : f32
    %170 = vector.broadcast %cst_40 : f32 to vector<1x128xf32>
    %171 = arith.subf %170, %163 : vector<1x128xf32>
    %172 = arith.mulf %171, %169 : vector<1x128xf32>
    %173 = arith.mulf %163, %146 : vector<1x128xf32>
    %174 = arith.addf %172, %173 : vector<1x128xf32>
    %cst_41 = arith.constant dense<0.000000e+00> : vector<1x384xf32>
    %175 = tpu.matmul %174, %0, %cst_41 {dimension_numbers = #tpu.dot_dimension_numbers<[1], [0], [0], [1], [0, 0, 1, 1], [], []>} : vector<1x128xf32>, vector<128x384xf32>, vector<1x384xf32> -> vector<1x384xf32>
    %176 = vector.extract_strided_slice %25 {offsets = [0, 0], sizes = [1, 128], strides = [1, 1]} : vector<1x384xf32> to vector<1x128xf32>
    %177 = vector.extract_strided_slice %175 {offsets = [0, 0], sizes = [1, 128], strides = [1, 1]} : vector<1x384xf32> to vector<1x128xf32>
    %178 = arith.addf %176, %177 : vector<1x128xf32>
    %179 = arith.negf %178 : vector<1x128xf32>
    %180 = math.exp %179 : vector<1x128xf32>
    %cst_42 = arith.constant 1.000000e+00 : f32
    %181 = vector.broadcast %cst_42 : f32 to vector<1x128xf32>
    %182 = arith.addf %181, %180 : vector<1x128xf32>
    %183 = arith.divf %181, %182 : vector<1x128xf32>
    %184 = vector.extract_strided_slice %25 {offsets = [0, 128], sizes = [1, 128], strides = [1, 1]} : vector<1x384xf32> to vector<1x128xf32>
    %185 = vector.extract_strided_slice %175 {offsets = [0, 128], sizes = [1, 128], strides = [1, 1]} : vector<1x384xf32> to vector<1x128xf32>
    %186 = arith.addf %184, %185 : vector<1x128xf32>
    %187 = arith.negf %186 : vector<1x128xf32>
    %188 = math.exp %187 : vector<1x128xf32>
    %cst_43 = arith.constant 1.000000e+00 : f32
    %189 = vector.broadcast %cst_43 : f32 to vector<1x128xf32>
    %190 = arith.addf %189, %188 : vector<1x128xf32>
    %191 = arith.divf %189, %190 : vector<1x128xf32>
    %192 = vector.extract_strided_slice %25 {offsets = [0, 256], sizes = [1, 128], strides = [1, 1]} : vector<1x384xf32> to vector<1x128xf32>
    %193 = vector.extract_strided_slice %175 {offsets = [0, 256], sizes = [1, 128], strides = [1, 1]} : vector<1x384xf32> to vector<1x128xf32>
    %194 = arith.addf %193, %1 : vector<1x128xf32>
    %195 = arith.mulf %183, %194 : vector<1x128xf32>
    %196 = arith.addf %192, %195 : vector<1x128xf32>
    %197 = math.tanh %196 : vector<1x128xf32>
    %cst_44 = arith.constant 1.000000e+00 : f32
    %198 = vector.broadcast %cst_44 : f32 to vector<1x128xf32>
    %199 = arith.subf %198, %191 : vector<1x128xf32>
    %200 = arith.mulf %199, %197 : vector<1x128xf32>
    %201 = arith.mulf %191, %174 : vector<1x128xf32>
    %202 = arith.addf %200, %201 : vector<1x128xf32>
    %cst_45 = arith.constant dense<0.000000e+00> : vector<1x384xf32>
    %203 = tpu.matmul %202, %0, %cst_45 {dimension_numbers = #tpu.dot_dimension_numbers<[1], [0], [0], [1], [0, 0, 1, 1], [], []>} : vector<1x128xf32>, vector<128x384xf32>, vector<1x384xf32> -> vector<1x384xf32>
    %204 = vector.extract_strided_slice %29 {offsets = [0, 0], sizes = [1, 128], strides = [1, 1]} : vector<1x384xf32> to vector<1x128xf32>
    %205 = vector.extract_strided_slice %203 {offsets = [0, 0], sizes = [1, 128], strides = [1, 1]} : vector<1x384xf32> to vector<1x128xf32>
    %206 = arith.addf %204, %205 : vector<1x128xf32>
    %207 = arith.negf %206 : vector<1x128xf32>
    %208 = math.exp %207 : vector<1x128xf32>
    %cst_46 = arith.constant 1.000000e+00 : f32
    %209 = vector.broadcast %cst_46 : f32 to vector<1x128xf32>
    %210 = arith.addf %209, %208 : vector<1x128xf32>
    %211 = arith.divf %209, %210 : vector<1x128xf32>
    %212 = vector.extract_strided_slice %29 {offsets = [0, 128], sizes = [1, 128], strides = [1, 1]} : vector<1x384xf32> to vector<1x128xf32>
    %213 = vector.extract_strided_slice %203 {offsets = [0, 128], sizes = [1, 128], strides = [1, 1]} : vector<1x384xf32> to vector<1x128xf32>
    %214 = arith.addf %212, %213 : vector<1x128xf32>
    %215 = arith.negf %214 : vector<1x128xf32>
    %216 = math.exp %215 : vector<1x128xf32>
    %cst_47 = arith.constant 1.000000e+00 : f32
    %217 = vector.broadcast %cst_47 : f32 to vector<1x128xf32>
    %218 = arith.addf %217, %216 : vector<1x128xf32>
    %219 = arith.divf %217, %218 : vector<1x128xf32>
    %220 = vector.extract_strided_slice %29 {offsets = [0, 256], sizes = [1, 128], strides = [1, 1]} : vector<1x384xf32> to vector<1x128xf32>
    %221 = vector.extract_strided_slice %203 {offsets = [0, 256], sizes = [1, 128], strides = [1, 1]} : vector<1x384xf32> to vector<1x128xf32>
    %222 = arith.addf %221, %1 : vector<1x128xf32>
    %223 = arith.mulf %211, %222 : vector<1x128xf32>
    %224 = arith.addf %220, %223 : vector<1x128xf32>
    %225 = math.tanh %224 : vector<1x128xf32>
    %cst_48 = arith.constant 1.000000e+00 : f32
    %226 = vector.broadcast %cst_48 : f32 to vector<1x128xf32>
    %227 = arith.subf %226, %219 : vector<1x128xf32>
    %228 = arith.mulf %227, %225 : vector<1x128xf32>
    %229 = arith.mulf %219, %202 : vector<1x128xf32>
    %230 = arith.addf %228, %229 : vector<1x128xf32>
    %cst_49 = arith.constant dense<0.000000e+00> : vector<1x384xf32>
    %231 = tpu.matmul %230, %0, %cst_49 {dimension_numbers = #tpu.dot_dimension_numbers<[1], [0], [0], [1], [0, 0, 1, 1], [], []>} : vector<1x128xf32>, vector<128x384xf32>, vector<1x384xf32> -> vector<1x384xf32>
    %232 = vector.extract_strided_slice %33 {offsets = [0, 0], sizes = [1, 128], strides = [1, 1]} : vector<1x384xf32> to vector<1x128xf32>
    %233 = vector.extract_strided_slice %231 {offsets = [0, 0], sizes = [1, 128], strides = [1, 1]} : vector<1x384xf32> to vector<1x128xf32>
    %234 = arith.addf %232, %233 : vector<1x128xf32>
    %235 = arith.negf %234 : vector<1x128xf32>
    %236 = math.exp %235 : vector<1x128xf32>
    %cst_50 = arith.constant 1.000000e+00 : f32
    %237 = vector.broadcast %cst_50 : f32 to vector<1x128xf32>
    %238 = arith.addf %237, %236 : vector<1x128xf32>
    %239 = arith.divf %237, %238 : vector<1x128xf32>
    %240 = vector.extract_strided_slice %33 {offsets = [0, 128], sizes = [1, 128], strides = [1, 1]} : vector<1x384xf32> to vector<1x128xf32>
    %241 = vector.extract_strided_slice %231 {offsets = [0, 128], sizes = [1, 128], strides = [1, 1]} : vector<1x384xf32> to vector<1x128xf32>
    %242 = arith.addf %240, %241 : vector<1x128xf32>
    %243 = arith.negf %242 : vector<1x128xf32>
    %244 = math.exp %243 : vector<1x128xf32>
    %cst_51 = arith.constant 1.000000e+00 : f32
    %245 = vector.broadcast %cst_51 : f32 to vector<1x128xf32>
    %246 = arith.addf %245, %244 : vector<1x128xf32>
    %247 = arith.divf %245, %246 : vector<1x128xf32>
    %248 = vector.extract_strided_slice %33 {offsets = [0, 256], sizes = [1, 128], strides = [1, 1]} : vector<1x384xf32> to vector<1x128xf32>
    %249 = vector.extract_strided_slice %231 {offsets = [0, 256], sizes = [1, 128], strides = [1, 1]} : vector<1x384xf32> to vector<1x128xf32>
    %250 = arith.addf %249, %1 : vector<1x128xf32>
    %251 = arith.mulf %239, %250 : vector<1x128xf32>
    %252 = arith.addf %248, %251 : vector<1x128xf32>
    %253 = math.tanh %252 : vector<1x128xf32>
    %cst_52 = arith.constant 1.000000e+00 : f32
    %254 = vector.broadcast %cst_52 : f32 to vector<1x128xf32>
    %255 = arith.subf %254, %247 : vector<1x128xf32>
    %256 = arith.mulf %255, %253 : vector<1x128xf32>
    %257 = arith.mulf %247, %230 : vector<1x128xf32>
    %258 = arith.addf %256, %257 : vector<1x128xf32>
    %259 = tpu.concatenate %62, %90, %118, %146, %174, %202, %230, %258 in 0 : vector<1x128xf32>, vector<1x128xf32>, vector<1x128xf32>, vector<1x128xf32>, vector<1x128xf32>, vector<1x128xf32>, vector<1x128xf32>, vector<1x128xf32> -> vector<8x128xf32>
    %260 = vector.extract_strided_slice %259 {offsets = [0, 0], sizes = [8, 32], strides = [1, 1]} : vector<8x128xf32> to vector<8x32xf32>
    %c0_53 = arith.constant 0 : index
    %c0_54 = arith.constant 0 : index
    %261 = vector.load %arg5[%c0_53, %c0_54] : memref<8x32xf32, #tpu.memory_space<vmem>>, vector<8x32xf32>
    tpu.vector_store %arg5[%c0_53, %c0_54], %260 {strides = array<i32>} : memref<8x32xf32, #tpu.memory_space<vmem>>, vector<8x32xf32>,
    %262 = vector.extract_strided_slice %258 {offsets = [0, 0], sizes = [1, 32], strides = [1, 1]} : vector<1x128xf32> to vector<1x32xf32>
    %c0_55 = arith.constant 0 : index
    %c0_56 = arith.constant 0 : index
    %263 = vector.load %arg6[%c0_55, %c0_56] : memref<1x32xf32, #tpu.memory_space<vmem>>, vector<1x32xf32>
    tpu.vector_store %arg6[%c0_55, %c0_56], %262 {strides = array<i32>} : memref<1x32xf32, #tpu.memory_space<vmem>>, vector<1x32xf32>,
    return
  }
}

</mosaic_0001>

<llo_original>
// kernel: _encoder_forward_sequence_jit.1
$region0: #{_encoder_forward_sequence_jit.1}
  #allocation0 [shape = 'u32[]', space=smem, size = 0x4, offset = 0x4, fixed_abs, tag = 'smem constant byte address 0x4 - core index']
  #allocation1 [shape = 'u32[144,128]{1,0:T(1,128)}', space=vmem, size = 0x12000, scoped, tag = 'internal scratch']
  %s0 = inlined_call_operand.vmem [shape: s32[8], index: 0, kind: input, shape index: {}]
  %s1 = inlined_call_operand.vmem [shape: f32[1,128], index: 1, kind: input, shape index: {}]
  %s2 = inlined_call_operand.hbm [shape: f32[16,1,384], index: 2, kind: input, shape index: {}]
  %s3 = inlined_call_operand.hbm [shape: f32[128,384], index: 3, kind: input, shape index: {}]
  %s4 = inlined_call_operand.vmem [shape: f32[1,128], index: 4, kind: input, shape index: {}]
  %s5 = inlined_call_operand.hbm [shape: f32[8,32], index: 5, kind: output, shape index: {0}]
  %s6 = inlined_call_operand.hbm [shape: f32[1,32], index: 6, kind: output, shape index: {1}]
  %7 = xla_tuple %s5, %s6
  %s8 = sld [smem:[#allocation0]]
  $region50: #{_encoder_forward_sequence_jit.1} parent=0
    _
  %s10 = ssub.s32 1, %s8
  %s11 = scalar_select 0, %s10, %s8
  $region1: #{_encoder_forward_sequence_jit.1} parent=0
    #allocation2 [shape = 'u8[512]{0}', space=smem, size = 0x200, scoped, tag = 'input window, operand 0, single buffered']
    #allocation3 [shape = 's32[1]{0}', space=sflag, size = 0x4, scoped, tag = 'scoped memory for _encoder_forward_sequence_jit.1']
    #allocation4 [shape = 's32[1]{0}', space=sflag, size = 0x4, scoped, tag = 'scoped memory for _encoder_forward_sequence_jit.1']
    #allocation5 [shape = 's32[1]{0}', space=sflag, size = 0x4, scoped, tag = 'scoped memory for _encoder_forward_sequence_jit.1']
    #allocation6 [shape = 'u8[24576]{0}', space=vmem, size = 0x6000, scoped, tag = 'input window, operand 2, single buffered']
    #allocation7 [shape = 'u8[196608]{0}', space=vmem, size = 0x30000, scoped, tag = 'input window, operand 3, single buffered']
    #allocation8 [shape = 's32[1]{0}', space=sflag, size = 0x4, scoped, tag = 'scoped memory for _encoder_forward_sequence_jit.1']
    #allocation9 [shape = 'u8[4096]{0}', space=vmem, size = 0x1000, scoped, tag = 'output window, operand 0, single buffered']
    #allocation10 [shape = 'u8[512]{0}', space=vmem, size = 0x400, scoped, tag = 'output window, operand 1, single buffered']
    #allocation11 [shape = 's32[1]{0}', space=sflag, size = 0x4, scoped, tag = 'scoped memory for _encoder_forward_sequence_jit.1']
    %12 = vsyncpa [#allocation5], 0
    %13 = vsyncpa [#allocation3], 0
    %14 = vsyncpa [#allocation8], 0
    %15 = vsyncpa [#allocation4], 0
    %16 = vsyncpa [#allocation11], 0
    // Predicated region
    $region2: #{_encoder_forward_sequence_jit.1} parent=1 // pred_check
      _
    $region3: #{_encoder_forward_sequence_jit.1} parent=1 // pred_check_branch
      %18 = sbr.rel (0) target = $region5
    $region4: #{_encoder_forward_sequence_jit.1} parent=1 // pred_region
      %s20 = ssub.s32 16, 16
      %21 = vsyncadd [#allocation5], %s20
      %s23 = sshll.u32 %s0, 4
      %s24 = int_to_ptr.vmem [resolvable:$true] %s23
      %26 = dma.vmem_to_smem %s24, 16, [#allocation2], [#allocation5]
    $region5: #{_encoder_forward_sequence_jit.1} parent=1 // pred_fallthru
      _
    // Predicated region
    $region6: #{_encoder_forward_sequence_jit.1} parent=1 // pred_check
      _
    $region7: #{_encoder_forward_sequence_jit.1} parent=1 // pred_check_branch
      %28 = sbr.rel (0) target = $region9
    $region8: #{_encoder_forward_sequence_jit.1} parent=1 // pred_region
      _
    $region9: #{_encoder_forward_sequence_jit.1} parent=1 // pred_fallthru
      _
    // Predicated region
    $region10: #{_encoder_forward_sequence_jit.1} parent=1 // pred_check
      _
    $region11: #{_encoder_forward_sequence_jit.1} parent=1 // pred_check_branch
      %30 = sbr.rel (0) target = $region13
    $region12: #{_encoder_forward_sequence_jit.1} parent=1 // pred_region
      %s32 = ssub.s32 768, 768
      %33 = vsyncadd [#allocation3], %s32
      %s34 = sshll.u32 [#allocation6], 4
      %s35 = int_to_ptr.vmem [resolvable:$true] %s34
      %40 = dma.hbm_to_vmem [thread:$0]  %s2, 768, %s35, [#allocation3], 48, 48, 3
    $region13: #{_encoder_forward_sequence_jit.1} parent=1 // pred_fallthru
      _
    // Predicated region
    $region14: #{_encoder_forward_sequence_jit.1} parent=1 // pred_check
      _
    $region15: #{_encoder_forward_sequence_jit.1} parent=1 // pred_check_branch
      %42 = sbr.rel (0) target = $region17
    $region16: #{_encoder_forward_sequence_jit.1} parent=1 // pred_region
      %s44 = ssub.s32 6144, 6144
      %45 = vsyncadd [#allocation8], %s44
      %s46 = sshll.u32 [#allocation7], 4
      %s47 = int_to_ptr.vmem [resolvable:$true] %s46
      %52 = dma.hbm_to_vmem [thread:$0]  %s3, 6144, %s47, [#allocation8], 384, 384, 24
    $region17: #{_encoder_forward_sequence_jit.1} parent=1 // pred_fallthru
      _
    // Predicated region
    $region18: #{_encoder_forward_sequence_jit.1} parent=1 // pred_check
      _
    $region19: #{_encoder_forward_sequence_jit.1} parent=1 // pred_check_branch
      %54 = sbr.rel (0) target = $region21
    $region20: #{_encoder_forward_sequence_jit.1} parent=1 // pred_region
      _
    $region21: #{_encoder_forward_sequence_jit.1} parent=1 // pred_fallthru
      _
    // Predicated region
    $region22: #{_encoder_forward_sequence_jit.1} parent=1 // pred_check
      _
    $region23: #{_encoder_forward_sequence_jit.1} parent=1 // pred_check_branch
      %56 = sbr.rel (0) target = $region25
    $region24: #{_encoder_forward_sequence_jit.1} parent=1 // pred_region
      %57 = dma.done [#allocation5], 16
    $region25: #{_encoder_forward_sequence_jit.1} parent=1 // pred_fallthru
      _
    // Predicated region
    $region26: #{_encoder_forward_sequence_jit.1} parent=1 // pred_check
      _
    $region27: #{_encoder_forward_sequence_jit.1} parent=1 // pred_check_branch
      %59 = sbr.rel (0) target = $region29
    $region28: #{_encoder_forward_sequence_jit.1} parent=1 // pred_region
      %60 = dma.done [#allocation3], 768
    $region29: #{_encoder_forward_sequence_jit.1} parent=1 // pred_fallthru
      _
    // Predicated region
    $region30: #{_encoder_forward_sequence_jit.1} parent=1 // pred_check
      _
    $region31: #{_encoder_forward_sequence_jit.1} parent=1 // pred_check_branch
      %62 = sbr.rel (0) target = $region33
    $region32: #{_encoder_forward_sequence_jit.1} parent=1 // pred_region
      %63 = dma.done [#allocation8], 6144
    $region33: #{_encoder_forward_sequence_jit.1} parent=1 // pred_fallthru
      _
    %64 = sfence
    %v65 = vld [vmem:[#allocation7] sm:$0xff]
    %v66 = vld [vmem:[#allocation7 + $0x8] sm:$0xff]
    %v67 = vld [vmem:[#allocation7 + $0x10] sm:$0xff]
    %v68 = vld [vmem:[#allocation7 + $0x18] sm:$0xff]
    %v69 = vld [vmem:[#allocation7 + $0x20] sm:$0xff]
    %v70 = vld [vmem:[#allocation7 + $0x28] sm:$0xff]
    %v71 = vld [vmem:[#allocation7 + $0x30] sm:$0xff]
    %v72 = vld [vmem:[#allocation7 + $0x38] sm:$0xff]
    %v73 = vld [vmem:[#allocation7 + $0x40] sm:$0xff]
    %v74 = vld [vmem:[#allocation7 + $0x48] sm:$0xff]
    %v75 = vld [vmem:[#allocation7 + $0x50] sm:$0xff]
    %v76 = vld [vmem:[#allocation7 + $0x58] sm:$0xff]
    %v77 = vld [vmem:[#allocation7 + $0x60] sm:$0xff]
    %v78 = vld [vmem:[#allocation7 + $0x68] sm:$0xff]
    %v79 = vld [vmem:[#allocation7 + $0x70] sm:$0xff]
    %v80 = vld [vmem:[#allocation7 + $0x78] sm:$0xff]
    %v81 = vld [vmem:[#allocation7 + $0x80] sm:$0xff]
    %v82 = vld [vmem:[#allocation7 + $0x88] sm:$0xff]
    %v83 = vld [vmem:[#allocation7 + $0x90] sm:$0xff]
    %v84 = vld [vmem:[#allocation7 + $0x98] sm:$0xff]
    %v85 = vld [vmem:[#allocation7 + $0xa0] sm:$0xff]
    %v86 = vld [vmem:[#allocation7 + $0xa8] sm:$0xff]
    %v87 = vld [vmem:[#allocation7 + $0xb0] sm:$0xff]
    %v88 = vld [vmem:[#allocation7 + $0xb8] sm:$0xff]
    %v89 = vld [vmem:[#allocation7 + $0xc0] sm:$0xff]
    %v90 = vld [vmem:[#allocation7 + $0xc8] sm:$0xff]
    %v91 = vld [vmem:[#allocation7 + $0xd0] sm:$0xff]
    %v92 = vld [vmem:[#allocation7 + $0xd8] sm:$0xff]
    %v93 = vld [vmem:[#allocation7 + $0xe0] sm:$0xff]
    %v94 = vld [vmem:[#allocation7 + $0xe8] sm:$0xff]
    %v95 = vld [vmem:[#allocation7 + $0xf0] sm:$0xff]
    %v96 = vld [vmem:[#allocation7 + $0xf8] sm:$0xff]
    %v97 = vld [vmem:[#allocation7 + $0x100] sm:$0xff]
    %v98 = vld [vmem:[#allocation7 + $0x108] sm:$0xff]
    %v99 = vld [vmem:[#allocation7 + $0x110] sm:$0xff]
    %v100 = vld [vmem:[#allocation7 + $0x118] sm:$0xff]
    %v101 = vld [vmem:[#allocation7 + $0x120] sm:$0xff]
    %v102 = vld [vmem:[#allocation7 + $0x128] sm:$0xff]
    %v103 = vld [vmem:[#allocation7 + $0x130] sm:$0xff]
    %v104 = vld [vmem:[#allocation7 + $0x138] sm:$0xff]
    %v105 = vld [vmem:[#allocation7 + $0x140] sm:$0xff]
    %v106 = vld [vmem:[#allocation7 + $0x148] sm:$0xff]
    %v107 = vld [vmem:[#allocation7 + $0x150] sm:$0xff]
    %v108 = vld [vmem:[#allocation7 + $0x158] sm:$0xff]
    %v109 = vld [vmem:[#allocation7 + $0x160] sm:$0xff]
    %v110 = vld [vmem:[#allocation7 + $0x168] sm:$0xff]
    %v111 = vld [vmem:[#allocation7 + $0x170] sm:$0xff]
    %v112 = vld [vmem:[#allocation7 + $0x178] sm:$0xff]
    %v113 = vld [vmem:[%s4] sm:$0x1]
    %s114 = sld [smem:[#allocation2]]
    %s115 = smul.u32 %s114, 3
    %s116 = scalar_lea.vmem [#allocation6], %s115
    %v117 = vld [vmem:[%s116] sm:$0x7]
    %s118 = sld [smem:[#allocation2 + $0x1]]
    %s119 = smul.u32 %s118, 3
    %s120 = scalar_lea.vmem [#allocation6], %s119
    %v121 = vld [vmem:[%s120] sm:$0x7]
    %s122 = sld [smem:[#allocation2 + $0x2]]
    %s123 = smul.u32 %s122, 3
    %s124 = scalar_lea.vmem [#allocation6], %s123
    %v125 = vld [vmem:[%s124] sm:$0x7]
    %s126 = sld [smem:[#allocation2 + $0x3]]
    %s127 = smul.u32 %s126, 3
    %s128 = scalar_lea.vmem [#allocation6], %s127
    %v129 = vld [vmem:[%s128] sm:$0x7]
    %s130 = sld [smem:[#allocation2 + $0x4]]
    %s131 = smul.u32 %s130, 3
    %s132 = scalar_lea.vmem [#allocation6], %s131
    %v133 = vld [vmem:[%s132] sm:$0x7]
    %s134 = sld [smem:[#allocation2 + $0x5]]
    %s135 = smul.u32 %s134, 3
    %s136 = scalar_lea.vmem [#allocation6], %s135
    %v137 = vld [vmem:[%s136] sm:$0x7]
    %s138 = sld [smem:[#allocation2 + $0x6]]
    %s139 = smul.u32 %s138, 3
    %s140 = scalar_lea.vmem [#allocation6], %s139
    %v141 = vld [vmem:[%s140] sm:$0x7]
    %s142 = sld [smem:[#allocation2 + $0x7]]
    %s143 = smul.u32 %s142, 3
    %s144 = scalar_lea.vmem [#allocation6], %s143
    %v145 = vld [vmem:[%s144] sm:$0x7]
    %v146 = vld [vmem:[%s1] sm:$0x1]
    %147 = vmatprep.subr.mxu0 %v66
    %148 = vmatpush1.msra.mxu0 %v65
    %149 = vmatprep.subr.mxu0 %v69
    %150 = vmatpush1.msra.mxu0 %v68
    %151 = vmatprep.subr.mxu0 %v72
    %152 = vmatpush1.msra.mxu0 %v71
    %153 = vmatprep.subr.mxu0 %v75
    %154 = vmatpush1.msra.mxu0 %v74
    %155 = vmatprep.subr.mxu0 %v78
    %156 = vmatpush1.msra.mxu0 %v77
    %157 = vmatprep.subr.mxu0 %v81
    %158 = vmatpush1.msra.mxu0 %v80
    %159 = vmatprep.subr.mxu0 %v84
    %160 = vmatpush1.msra.mxu0 %v83
    %161 = vmatprep.subr.mxu0 %v87
    %162 = vmatpush1.msra.mxu0 %v86
    %163 = vmatprep.subr.mxu0 %v90
    %164 = vmatpush1.msra.mxu0 %v89
    %165 = vmatprep.subr.mxu0 %v93
    %166 = vmatpush1.msra.mxu0 %v92
    %167 = vmatprep.subr.mxu0 %v96
    %168 = vmatpush1.msra.mxu0 %v95
    %169 = vmatprep.subr.mxu0 %v99
    %170 = vmatpush1.msra.mxu0 %v98
    %171 = vmatprep.subr.mxu0 %v102
    %172 = vmatpush1.msra.mxu0 %v101
    %173 = vmatprep.subr.mxu0 %v105
    %174 = vmatpush1.msra.mxu0 %v104
    %175 = vmatprep.subr.mxu0 %v108
    %176 = vmatpush1.msra.mxu0 %v107
    %177 = vmatprep.subr.mxu0 %v111
    %178 = vmatpush1.msra.mxu0 %v110
    %179 = vmatprep.subr.mxu0 0.0
    %180 = vmatpush1.msra.mxu0 0.0
    %181 = vmatprep.subr.mxu0 0.0
    %182 = vmatpush1.msra.mxu0 0.0
    %183 = vmatprep.subr.mxu0 0.0
    %184 = vmatpush1.msra.mxu0 0.0
    %185 = vmatprep.subr.mxu0 0.0
    %186 = vmatpush1.msra.mxu0 0.0
    %187 = vmatprep.subr.mxu0 0.0
    %188 = vmatpush1.msra.mxu0 0.0
    %189 = vmatprep.subr.mxu0 0.0
    %190 = vmatpush1.msra.mxu0 0.0
    %191 = vmatprep.subr.mxu0 0.0
    %192 = vmatpush1.msra.mxu0 0.0
    %193 = vmatprep.subr.mxu0 0.0
    %194 = vmatpush1.msra.mxu0 0.0
    %195 = vmatprep.subr.mxu0 0.0
    %196 = vmatpush1.msra.mxu0 0.0
    %197 = vmatprep.subr.mxu0 0.0
    %198 = vmatpush1.msra.mxu0 0.0
    %199 = vmatprep.subr.mxu0 0.0
    %200 = vmatpush1.msra.mxu0 0.0
    %201 = vmatprep.subr.mxu0 0.0
    %202 = vmatpush1.msra.mxu0 0.0
    %203 = vmatprep.subr.mxu0 0.0
    %204 = vmatpush1.msra.mxu0 0.0
    %205 = vmatprep.subr.mxu0 0.0
    %206 = vmatpush1.msra.mxu0 0.0
    %207 = vmatprep.subr.mxu0 0.0
    %208 = vmatpush1.msra.mxu0 0.0
    %209 = vmatprep.subr.mxu0 0.0
    %210 = vmatpush1.msra.mxu0 0.0
    %211 = vmatprep.mubr.f32.mxu0 0.0
    %212 = vmatmul.mubr.f32.gmra.mrb[0].mxu0 %v146
    %v213 = vpop.f32.mrb[0].mxu0
    %v214 = vadd.f32 0.0, %v213
    %v215 = vpop.f32.mrb[0].mxu0
    %v216 = vadd.f32 0.0, %v215
    %217 = vdwg.mxu0
    %218 = vmatprep.subr.mxu0 0.0
    %219 = vmatpush1.msra.mxu0 %v67
    %220 = vmatprep.subr.mxu0 0.0
    %221 = vmatpush1.msra.mxu0 %v70
    %222 = vmatprep.subr.mxu0 0.0
    %223 = vmatpush1.msra.mxu0 %v73
    %224 = vmatprep.subr.mxu0 0.0
    %225 = vmatpush1.msra.mxu0 %v76
    %226 = vmatprep.subr.mxu0 0.0
    %227 = vmatpush1.msra.mxu0 %v79
    %228 = vmatprep.subr.mxu0 0.0
    %229 = vmatpush1.msra.mxu0 %v82
    %230 = vmatprep.subr.mxu0 0.0
    %231 = vmatpush1.msra.mxu0 %v85
    %232 = vmatprep.subr.mxu0 0.0
    %233 = vmatpush1.msra.mxu0 %v88
    %234 = vmatprep.subr.mxu0 0.0
    %235 = vmatpush1.msra.mxu0 %v91
    %236 = vmatprep.subr.mxu0 0.0
    %237 = vmatpush1.msra.mxu0 %v94
    %238 = vmatprep.subr.mxu0 0.0
    %239 = vmatpush1.msra.mxu0 %v97
    %240 = vmatprep.subr.mxu0 0.0
    %241 = vmatpush1.msra.mxu0 %v100
    %242 = vmatprep.subr.mxu0 0.0
    %243 = vmatpush1.msra.mxu0 %v103
    %244 = vmatprep.subr.mxu0 0.0
    %245 = vmatpush1.msra.mxu0 %v106
    %246 = vmatprep.subr.mxu0 0.0
    %247 = vmatpush1.msra.mxu0 %v109
    %248 = vmatprep.subr.mxu0 0.0
    %249 = vmatpush1.msra.mxu0 %v112
    %250 = vmatprep.subr.mxu0 0.0
    %251 = vmatpush1.msra.mxu0 0.0
    %252 = vmatprep.subr.mxu0 0.0
    %253 = vmatpush1.msra.mxu0 0.0
    %254 = vmatprep.subr.mxu0 0.0
    %255 = vmatpush1.msra.mxu0 0.0
    %256 = vmatprep.subr.mxu0 0.0
    %257 = vmatpush1.msra.mxu0 0.0
    %258 = vmatprep.subr.mxu0 0.0
    %259 = vmatpush1.msra.mxu0 0.0
    %260 = vmatprep.subr.mxu0 0.0
    %261 = vmatpush1.msra.mxu0 0.0
    %262 = vmatprep.subr.mxu0 0.0
    %263 = vmatpush1.msra.mxu0 0.0
    %264 = vmatprep.subr.mxu0 0.0
    %265 = vmatpush1.msra.mxu0 0.0
    %266 = vmatprep.subr.mxu0 0.0
    %267 = vmatpush1.msra.mxu0 0.0
    %268 = vmatprep.subr.mxu0 0.0
    %269 = vmatpush1.msra.mxu0 0.0
    %270 = vmatprep.subr.mxu0 0.0
    %271 = vmatpush1.msra.mxu0 0.0
    %272 = vmatprep.subr.mxu0 0.0
    %273 = vmatpush1.msra.mxu0 0.0
    %274 = vmatprep.subr.mxu0 0.0
    %275 = vmatpush1.msra.mxu0 0.0
    %276 = vmatprep.subr.mxu0 0.0
    %277 = vmatpush1.msra.mxu0 0.0
    %278 = vmatprep.subr.mxu0 0.0
    %279 = vmatpush1.msra.mxu0 0.0
    %280 = vmatprep.subr.mxu0 0.0
    %281 = vmatpush1.msra.mxu0 0.0
    %282 = vmatprep.mubr.f32.mxu0 0.0
    %283 = vmatmul.mubr.f32.gmra.mrb[0].mxu0 %v146
    %v284 = vpop.f32.mrb[0].mxu0
    %v285 = vadd.f32 0.0, %v284
    %v286 = vpop.f32.mrb[0].mxu0
    %287 = vdwg.mxu0
    %v288 = vadd.f32 %v117, %v214
    %v289 = vxor.u32 %v288, 2147483648
    %v290 = vmul.f32 %v289, 1.442695
    %v291 = vpow.pop %v290
    %v292 = vadd.f32 %v291, 1.0
    %v293 = vrcp.pop %v292
    %v294 = vmul.f32 1.0, %v293
    %v296 = vrot.slane %v117, 1
    %v298 = vadd.f32 %v296, %v216
    %v299 = vxor.u32 %v298, 2147483648
    %v300 = vmul.f32 %v299, 1.442695
    %v301 = vpow.pop %v300
    %v302 = vadd.f32 %v301, 1.0
    %v303 = vrcp.pop %v302
    %v304 = vmul.f32 1.0, %v303
    %v305 = vadd.f32 %v285, %v113
    %v306 = vmul.f32 %v294, %v305
    %v307 = vrot.slane %v117, 2
    %v309 = vadd.f32 %v307, %v306
    %v310 = vtanh.pop %v309
    %v311 = vsub.f32 1.0, %v304
    %v312 = vmul.f32 %v311, %v310
    %v313 = vmul.f32 %v304, %v146
    %v314 = vadd.f32 %v312, %v313
    %315 = vmatprep.subr.mxu0 %v66
    %316 = vmatpush1.msra.mxu0 %v65
    %317 = vmatprep.subr.mxu0 %v69
    %318 = vmatpush1.msra.mxu0 %v68
    %319 = vmatprep.subr.mxu0 %v72
    %320 = vmatpush1.msra.mxu0 %v71
    %321 = vmatprep.subr.mxu0 %v75
    %322 = vmatpush1.msra.mxu0 %v74
    %323 = vmatprep.subr.mxu0 %v78
    %324 = vmatpush1.msra.mxu0 %v77
    %325 = vmatprep.subr.mxu0 %v81
    %326 = vmatpush1.msra.mxu0 %v80
    %327 = vmatprep.subr.mxu0 %v84
    %328 = vmatpush1.msra.mxu0 %v83
    %329 = vmatprep.subr.mxu0 %v87
    %330 = vmatpush1.msra.mxu0 %v86
    %331 = vmatprep.subr.mxu0 %v90
    %332 = vmatpush1.msra.mxu0 %v89
    %333 = vmatprep.subr.mxu0 %v93
    %334 = vmatpush1.msra.mxu0 %v92
    %335 = vmatprep.subr.mxu0 %v96
    %336 = vmatpush1.msra.mxu0 %v95
    %337 = vmatprep.subr.mxu0 %v99
    %338 = vmatpush1.msra.mxu0 %v98
    %339 = vmatprep.subr.mxu0 %v102
    %340 = vmatpush1.msra.mxu0 %v101
    %341 = vmatprep.subr.mxu0 %v105
    %342 = vmatpush1.msra.mxu0 %v104
    %343 = vmatprep.subr.mxu0 %v108
    %344 = vmatpush1.msra.mxu0 %v107
    %345 = vmatprep.subr.mxu0 %v111
    %346 = vmatpush1.msra.mxu0 %v110
    %347 = vmatprep.subr.mxu0 0.0
    %348 = vmatpush1.msra.mxu0 0.0
    %349 = vmatprep.subr.mxu0 0.0
    %350 = vmatpush1.msra.mxu0 0.0
    %351 = vmatprep.subr.mxu0 0.0
    %352 = vmatpush1.msra.mxu0 0.0
    %353 = vmatprep.subr.mxu0 0.0
    %354 = vmatpush1.msra.mxu0 0.0
    %355 = vmatprep.subr.mxu0 0.0
    %356 = vmatpush1.msra.mxu0 0.0
    %357 = vmatprep.subr.mxu0 0.0
    %358 = vmatpush1.msra.mxu0 0.0
    %359 = vmatprep.subr.mxu0 0.0
    %360 = vmatpush1.msra.mxu0 0.0
    %361 = vmatprep.subr.mxu0 0.0
    %362 = vmatpush1.msra.mxu0 0.0
    %363 = vmatprep.subr.mxu0 0.0
    %364 = vmatpush1.msra.mxu0 0.0
    %365 = vmatprep.subr.mxu0 0.0
    %366 = vmatpush1.msra.mxu0 0.0
    %367 = vmatprep.subr.mxu0 0.0
    %368 = vmatpush1.msra.mxu0 0.0
    %369 = vmatprep.subr.mxu0 0.0
    %370 = vmatpush1.msra.mxu0 0.0
    %371 = vmatprep.subr.mxu0 0.0
    %372 = vmatpush1.msra.mxu0 0.0
    %373 = vmatprep.subr.mxu0 0.0
    %374 = vmatpush1.msra.mxu0 0.0
    %375 = vmatprep.subr.mxu0 0.0
    %376 = vmatpush1.msra.mxu0 0.0
    %377 = vmatprep.subr.mxu0 0.0
    %378 = vmatpush1.msra.mxu0 0.0
    %379 = vmatprep.mubr.f32.mxu0 0.0
    %380 = vmatmul.mubr.f32.gmra.mrb[0].mxu0 %v314
    %v381 = vpop.f32.mrb[0].mxu0
    %v382 = vadd.f32 0.0, %v381
    %v383 = vpop.f32.mrb[0].mxu0
    %v384 = vadd.f32 0.0, %v383
    %385 = vdwg.mxu0
    %386 = vmatprep.subr.mxu0 0.0
    %387 = vmatpush1.msra.mxu0 %v67
    %388 = vmatprep.subr.mxu0 0.0
    %389 = vmatpush1.msra.mxu0 %v70
    %390 = vmatprep.subr.mxu0 0.0
    %391 = vmatpush1.msra.mxu0 %v73
    %392 = vmatprep.subr.mxu0 0.0
    %393 = vmatpush1.msra.mxu0 %v76
    %394 = vmatprep.subr.mxu0 0.0
    %395 = vmatpush1.msra.mxu0 %v79
    %396 = vmatprep.subr.mxu0 0.0
    %397 = vmatpush1.msra.mxu0 %v82
    %398 = vmatprep.subr.mxu0 0.0
    %399 = vmatpush1.msra.mxu0 %v85
    %400 = vmatprep.subr.mxu0 0.0
    %401 = vmatpush1.msra.mxu0 %v88
    %402 = vmatprep.subr.mxu0 0.0
    %403 = vmatpush1.msra.mxu0 %v91
    %404 = vmatprep.subr.mxu0 0.0
    %405 = vmatpush1.msra.mxu0 %v94
    %406 = vmatprep.subr.mxu0 0.0
    %407 = vmatpush1.msra.mxu0 %v97
    %408 = vmatprep.subr.mxu0 0.0
    %409 = vmatpush1.msra.mxu0 %v100
    %410 = vmatprep.subr.mxu0 0.0
    %411 = vmatpush1.msra.mxu0 %v103
    %412 = vmatprep.subr.mxu0 0.0
    %413 = vmatpush1.msra.mxu0 %v106
    %414 = vmatprep.subr.mxu0 0.0
    %415 = vmatpush1.msra.mxu0 %v109
    %416 = vmatprep.subr.mxu0 0.0
    %417 = vmatpush1.msra.mxu0 %v112
    %418 = vmatprep.subr.mxu0 0.0
    %419 = vmatpush1.msra.mxu0 0.0
    %420 = vmatprep.subr.mxu0 0.0
    %421 = vmatpush1.msra.mxu0 0.0
    %422 = vmatprep.subr.mxu0 0.0
    %423 = vmatpush1.msra.mxu0 0.0
    %424 = vmatprep.subr.mxu0 0.0
    %425 = vmatpush1.msra.mxu0 0.0
    %426 = vmatprep.subr.mxu0 0.0
    %427 = vmatpush1.msra.mxu0 0.0
    %428 = vmatprep.subr.mxu0 0.0
    %429 = vmatpush1.msra.mxu0 0.0
    %430 = vmatprep.subr.mxu0 0.0
    %431 = vmatpush1.msra.mxu0 0.0
    %432 = vmatprep.subr.mxu0 0.0
    %433 = vmatpush1.msra.mxu0 0.0
    %434 = vmatprep.subr.mxu0 0.0
    %435 = vmatpush1.msra.mxu0 0.0
    %436 = vmatprep.subr.mxu0 0.0
    %437 = vmatpush1.msra.mxu0 0.0
    %438 = vmatprep.subr.mxu0 0.0
    %439 = vmatpush1.msra.mxu0 0.0
    %440 = vmatprep.subr.mxu0 0.0
    %441 = vmatpush1.msra.mxu0 0.0
    %442 = vmatprep.subr.mxu0 0.0
    %443 = vmatpush1.msra.mxu0 0.0
    %444 = vmatprep.subr.mxu0 0.0
    %445 = vmatpush1.msra.mxu0 0.0
    %446 = vmatprep.subr.mxu0 0.0
    %447 = vmatpush1.msra.mxu0 0.0
    %448 = vmatprep.subr.mxu0 0.0
    %449 = vmatpush1.msra.mxu0 0.0
    %450 = vmatprep.mubr.f32.mxu0 0.0
    %451 = vmatmul.mubr.f32.gmra.mrb[0].mxu0 %v314
    %v452 = vpop.f32.mrb[0].mxu0
    %v453 = vadd.f32 0.0, %v452
    %v454 = vpop.f32.mrb[0].mxu0
    %455 = vdwg.mxu0
    %v456 = vadd.f32 %v121, %v382
    %v457 = vxor.u32 %v456, 2147483648
    %v458 = vmul.f32 %v457, 1.442695
    %v459 = vpow.pop %v458
    %v460 = vadd.f32 %v459, 1.0
    %v461 = vrcp.pop %v460
    %v462 = vmul.f32 1.0, %v461
    %v464 = vrot.slane %v121, 1
    %v466 = vadd.f32 %v464, %v384
    %v467 = vxor.u32 %v466, 2147483648
    %v468 = vmul.f32 %v467, 1.442695
    %v469 = vpow.pop %v468
    %v470 = vadd.f32 %v469, 1.0
    %v471 = vrcp.pop %v470
    %v472 = vmul.f32 1.0, %v471
    %v473 = vadd.f32 %v453, %v113
    %v474 = vmul.f32 %v462, %v473
    %v475 = vrot.slane %v121, 2
    %v477 = vadd.f32 %v475, %v474
    %v478 = vtanh.pop %v477
    %v479 = vsub.f32 1.0, %v472
    %v480 = vmul.f32 %v479, %v478
    %v481 = vmul.f32 %v472, %v314
    %v482 = vadd.f32 %v480, %v481
    %483 = vmatprep.subr.mxu0 %v66
    %484 = vmatpush1.msra.mxu0 %v65
    %485 = vmatprep.subr.mxu0 %v69
    %486 = vmatpush1.msra.mxu0 %v68
    %487 = vmatprep.subr.mxu0 %v72
    %488 = vmatpush1.msra.mxu0 %v71
    %489 = vmatprep.subr.mxu0 %v75
    %490 = vmatpush1.msra.mxu0 %v74
    %491 = vmatprep.subr.mxu0 %v78
    %492 = vmatpush1.msra.mxu0 %v77
    %493 = vmatprep.subr.mxu0 %v81
    %494 = vmatpush1.msra.mxu0 %v80
    %495 = vmatprep.subr.mxu0 %v84
    %496 = vmatpush1.msra.mxu0 %v83
    %497 = vmatprep.subr.mxu0 %v87
    %498 = vmatpush1.msra.mxu0 %v86
    %499 = vmatprep.subr.mxu0 %v90
    %500 = vmatpush1.msra.mxu0 %v89
    %501 = vmatprep.subr.mxu0 %v93
    %502 = vmatpush1.msra.mxu0 %v92
    %503 = vmatprep.subr.mxu0 %v96
    %504 = vmatpush1.msra.mxu0 %v95
    %505 = vmatprep.subr.mxu0 %v99
    %506 = vmatpush1.msra.mxu0 %v98
    %507 = vmatprep.subr.mxu0 %v102
    %508 = vmatpush1.msra.mxu0 %v101
    %509 = vmatprep.subr.mxu0 %v105
    %510 = vmatpush1.msra.mxu0 %v104
    %511 = vmatprep.subr.mxu0 %v108
    %512 = vmatpush1.msra.mxu0 %v107
    %513 = vmatprep.subr.mxu0 %v111
    %514 = vmatpush1.msra.mxu0 %v110
    %515 = vmatprep.subr.mxu0 0.0
    %516 = vmatpush1.msra.mxu0 0.0
    %517 = vmatprep.subr.mxu0 0.0
    %518 = vmatpush1.msra.mxu0 0.0
    %519 = vmatprep.subr.mxu0 0.0
    %520 = vmatpush1.msra.mxu0 0.0
    %521 = vmatprep.subr.mxu0 0.0
    %522 = vmatpush1.msra.mxu0 0.0
    %523 = vmatprep.subr.mxu0 0.0
    %524 = vmatpush1.msra.mxu0 0.0
    %525 = vmatprep.subr.mxu0 0.0
    %526 = vmatpush1.msra.mxu0 0.0
    %527 = vmatprep.subr.mxu0 0.0
    %528 = vmatpush1.msra.mxu0 0.0
    %529 = vmatprep.subr.mxu0 0.0
    %530 = vmatpush1.msra.mxu0 0.0
    %531 = vmatprep.subr.mxu0 0.0
    %532 = vmatpush1.msra.mxu0 0.0
    %533 = vmatprep.subr.mxu0 0.0
    %534 = vmatpush1.msra.mxu0 0.0
    %535 = vmatprep.subr.mxu0 0.0
    %536 = vmatpush1.msra.mxu0 0.0
    %537 = vmatprep.subr.mxu0 0.0
    %538 = vmatpush1.msra.mxu0 0.0
    %539 = vmatprep.subr.mxu0 0.0
    %540 = vmatpush1.msra.mxu0 0.0
    %541 = vmatprep.subr.mxu0 0.0
    %542 = vmatpush1.msra.mxu0 0.0
    %543 = vmatprep.subr.mxu0 0.0
    %544 = vmatpush1.msra.mxu0 0.0
    %545 = vmatprep.subr.mxu0 0.0
    %546 = vmatpush1.msra.mxu0 0.0
    %547 = vmatprep.mubr.f32.mxu0 0.0
    %548 = vmatmul.mubr.f32.gmra.mrb[0].mxu0 %v482
    %v549 = vpop.f32.mrb[0].mxu0
    %v550 = vadd.f32 0.0, %v549
    %v551 = vpop.f32.mrb[0].mxu0
    %v552 = vadd.f32 0.0, %v551
    %553 = vdwg.mxu0
    %554 = vmatprep.subr.mxu0 0.0
    %555 = vmatpush1.msra.mxu0 %v67
    %556 = vmatprep.subr.mxu0 0.0
    %557 = vmatpush1.msra.mxu0 %v70
    %558 = vmatprep.subr.mxu0 0.0
    %559 = vmatpush1.msra.mxu0 %v73
    %560 = vmatprep.subr.mxu0 0.0
    %561 = vmatpush1.msra.mxu0 %v76
    %562 = vmatprep.subr.mxu0 0.0
    %563 = vmatpush1.msra.mxu0 %v79
    %564 = vmatprep.subr.mxu0 0.0
    %565 = vmatpush1.msra.mxu0 %v82
    %566 = vmatprep.subr.mxu0 0.0
    %567 = vmatpush1.msra.mxu0 %v85
    %568 = vmatprep.subr.mxu0 0.0
    %569 = vmatpush1.msra.mxu0 %v88
    %570 = vmatprep.subr.mxu0 0.0
    %571 = vmatpush1.msra.mxu0 %v91
    %572 = vmatprep.subr.mxu0 0.0
    %573 = vmatpush1.msra.mxu0 %v94
    %574 = vmatprep.subr.mxu0 0.0
    %575 = vmatpush1.msra.mxu0 %v97
    %576 = vmatprep.subr.mxu0 0.0
    %577 = vmatpush1.msra.mxu0 %v100
    %578 = vmatprep.subr.mxu0 0.0
    %579 = vmatpush1.msra.mxu0 %v103
    %580 = vmatprep.subr.mxu0 0.0
    %581 = vmatpush1.msra.mxu0 %v106
    %582 = vmatprep.subr.mxu0 0.0
    %583 = vmatpush1.msra.mxu0 %v109
    %584 = vmatprep.subr.mxu0 0.0
    %585 = vmatpush1.msra.mxu0 %v112
    %586 = vmatprep.subr.mxu0 0.0
    %587 = vmatpush1.msra.mxu0 0.0
    %588 = vmatprep.subr.mxu0 0.0
    %589 = vmatpush1.msra.mxu0 0.0
    %590 = vmatprep.subr.mxu0 0.0
    %591 = vmatpush1.msra.mxu0 0.0
    %592 = vmatprep.subr.mxu0 0.0
    %593 = vmatpush1.msra.mxu0 0.0
    %594 = vmatprep.subr.mxu0 0.0
    %595 = vmatpush1.msra.mxu0 0.0
    %596 = vmatprep.subr.mxu0 0.0
    %597 = vmatpush1.msra.mxu0 0.0
    %598 = vmatprep.subr.mxu0 0.0
    %599 = vmatpush1.msra.mxu0 0.0
    %600 = vmatprep.subr.mxu0 0.0
    %601 = vmatpush1.msra.mxu0 0.0
    %602 = vmatprep.subr.mxu0 0.0
    %603 = vmatpush1.msra.mxu0 0.0
    %604 = vmatprep.subr.mxu0 0.0
    %605 = vmatpush1.msra.mxu0 0.0
    %606 = vmatprep.subr.mxu0 0.0
    %607 = vmatpush1.msra.mxu0 0.0
    %608 = vmatprep.subr.mxu0 0.0
    %609 = vmatpush1.msra.mxu0 0.0
    %610 = vmatprep.subr.mxu0 0.0
    %611 = vmatpush1.msra.mxu0 0.0
    %612 = vmatprep.subr.mxu0 0.0
    %613 = vmatpush1.msra.mxu0 0.0
    %614 = vmatprep.subr.mxu0 0.0
    %615 = vmatpush1.msra.mxu0 0.0
    %616 = vmatprep.subr.mxu0 0.0
    %617 = vmatpush1.msra.mxu0 0.0
    %618 = vmatprep.mubr.f32.mxu0 0.0
    %619 = vmatmul.mubr.f32.gmra.mrb[0].mxu0 %v482
    %v620 = vpop.f32.mrb[0].mxu0
    %v621 = vadd.f32 0.0, %v620
    %v622 = vpop.f32.mrb[0].mxu0
    %623 = vdwg.mxu0
    %v624 = vadd.f32 %v125, %v550
    %v625 = vxor.u32 %v624, 2147483648
    %v626 = vmul.f32 %v625, 1.442695
    %v627 = vpow.pop %v626
    %v628 = vadd.f32 %v627, 1.0
    %v629 = vrcp.pop %v628
    %v630 = vmul.f32 1.0, %v629
    %v632 = vrot.slane %v125, 1
    %v634 = vadd.f32 %v632, %v552
    %v635 = vxor.u32 %v634, 2147483648
    %v636 = vmul.f32 %v635, 1.442695
    %v637 = vpow.pop %v636
    %v638 = vadd.f32 %v637, 1.0
    %v639 = vrcp.pop %v638
    %v640 = vmul.f32 1.0, %v639
    %v641 = vadd.f32 %v621, %v113
    %v642 = vmul.f32 %v630, %v641
    %v643 = vrot.slane %v125, 2
    %v645 = vadd.f32 %v643, %v642
    %v646 = vtanh.pop %v645
    %v647 = vsub.f32 1.0, %v640
    %v648 = vmul.f32 %v647, %v646
    %v649 = vmul.f32 %v640, %v482
    %v650 = vadd.f32 %v648, %v649
    %651 = vmatprep.subr.mxu0 %v66
    %652 = vmatpush1.msra.mxu0 %v65
    %653 = vmatprep.subr.mxu0 %v69
    %654 = vmatpush1.msra.mxu0 %v68
    %655 = vmatprep.subr.mxu0 %v72
    %656 = vmatpush1.msra.mxu0 %v71
    %657 = vmatprep.subr.mxu0 %v75
    %658 = vmatpush1.msra.mxu0 %v74
    %659 = vmatprep.subr.mxu0 %v78
    %660 = vmatpush1.msra.mxu0 %v77
    %661 = vmatprep.subr.mxu0 %v81
    %662 = vmatpush1.msra.mxu0 %v80
    %663 = vmatprep.subr.mxu0 %v84
    %664 = vmatpush1.msra.mxu0 %v83
    %665 = vmatprep.subr.mxu0 %v87
    %666 = vmatpush1.msra.mxu0 %v86
    %667 = vmatprep.subr.mxu0 %v90
    %668 = vmatpush1.msra.mxu0 %v89
    %669 = vmatprep.subr.mxu0 %v93
    %670 = vmatpush1.msra.mxu0 %v92
    %671 = vmatprep.subr.mxu0 %v96
    %672 = vmatpush1.msra.mxu0 %v95
    %673 = vmatprep.subr.mxu0 %v99
    %674 = vmatpush1.msra.mxu0 %v98
    %675 = vmatprep.subr.mxu0 %v102
    %676 = vmatpush1.msra.mxu0 %v101
    %677 = vmatprep.subr.mxu0 %v105
    %678 = vmatpush1.msra.mxu0 %v104
    %679 = vmatprep.subr.mxu0 %v108
    %680 = vmatpush1.msra.mxu0 %v107
    %681 = vmatprep.subr.mxu0 %v111
    %682 = vmatpush1.msra.mxu0 %v110
    %683 = vmatprep.subr.mxu0 0.0
    %684 = vmatpush1.msra.mxu0 0.0
    %685 = vmatprep.subr.mxu0 0.0
    %686 = vmatpush1.msra.mxu0 0.0
    %687 = vmatprep.subr.mxu0 0.0
    %688 = vmatpush1.msra.mxu0 0.0
    %689 = vmatprep.subr.mxu0 0.0
    %690 = vmatpush1.msra.mxu0 0.0
    %691 = vmatprep.subr.mxu0 0.0
    %692 = vmatpush1.msra.mxu0 0.0
    %693 = vmatprep.subr.mxu0 0.0
    %694 = vmatpush1.msra.mxu0 0.0
    %695 = vmatprep.subr.mxu0 0.0
    %696 = vmatpush1.msra.mxu0 0.0
    %697 = vmatprep.subr.mxu0 0.0
    %698 = vmatpush1.msra.mxu0 0.0
    %699 = vmatprep.subr.mxu0 0.0
    %700 = vmatpush1.msra.mxu0 0.0
    %701 = vmatprep.subr.mxu0 0.0
    %702 = vmatpush1.msra.mxu0 0.0
    %703 = vmatprep.subr.mxu0 0.0
    %704 = vmatpush1.msra.mxu0 0.0
    %705 = vmatprep.subr.mxu0 0.0
    %706 = vmatpush1.msra.mxu0 0.0
    %707 = vmatprep.subr.mxu0 0.0
    %708 = vmatpush1.msra.mxu0 0.0
    %709 = vmatprep.subr.mxu0 0.0
    %710 = vmatpush1.msra.mxu0 0.0
    %711 = vmatprep.subr.mxu0 0.0
    %712 = vmatpush1.msra.mxu0 0.0
    %713 = vmatprep.subr.mxu0 0.0
    %714 = vmatpush1.msra.mxu0 0.0
    %715 = vmatprep.mubr.f32.mxu0 0.0
    %716 = vmatmul.mubr.f32.gmra.mrb[0].mxu0 %v650
    %v717 = vpop.f32.mrb[0].mxu0
    %v718 = vadd.f32 0.0, %v717
    %v719 = vpop.f32.mrb[0].mxu0
    %v720 = vadd.f32 0.0, %v719
    %721 = vdwg.mxu0
    %722 = vmatprep.subr.mxu0 0.0
    %723 = vmatpush1.msra.mxu0 %v67
    %724 = vmatprep.subr.mxu0 0.0
    %725 = vmatpush1.msra.mxu0 %v70
    %726 = vmatprep.subr.mxu0 0.0
    %727 = vmatpush1.msra.mxu0 %v73
    %728 = vmatprep.subr.mxu0 0.0
    %729 = vmatpush1.msra.mxu0 %v76
    %730 = vmatprep.subr.mxu0 0.0
    %731 = vmatpush1.msra.mxu0 %v79
    %732 = vmatprep.subr.mxu0 0.0
    %733 = vmatpush1.msra.mxu0 %v82
    %734 = vmatprep.subr.mxu0 0.0
    %735 = vmatpush1.msra.mxu0 %v85
    %736 = vmatprep.subr.mxu0 0.0
    %737 = vmatpush1.msra.mxu0 %v88
    %738 = vmatprep.subr.mxu0 0.0
    %739 = vmatpush1.msra.mxu0 %v91
    %740 = vmatprep.subr.mxu0 0.0
    %741 = vmatpush1.msra.mxu0 %v94
    %742 = vmatprep.subr.mxu0 0.0
    %743 = vmatpush1.msra.mxu0 %v97
    %744 = vmatprep.subr.mxu0 0.0
    %745 = vmatpush1.msra.mxu0 %v100
    %746 = vmatprep.subr.mxu0 0.0
    %747 = vmatpush1.msra.mxu0 %v103
    %748 = vmatprep.subr.mxu0 0.0
    %749 = vmatpush1.msra.mxu0 %v106
    %750 = vmatprep.subr.mxu0 0.0
    %751 = vmatpush1.msra.mxu0 %v109
    %752 = vmatprep.subr.mxu0 0.0
    %753 = vmatpush1.msra.mxu0 %v112
    %754 = vmatprep.subr.mxu0 0.0
    %755 = vmatpush1.msra.mxu0 0.0
    %756 = vmatprep.subr.mxu0 0.0
    %757 = vmatpush1.msra.mxu0 0.0
    %758 = vmatprep.subr.mxu0 0.0
    %759 = vmatpush1.msra.mxu0 0.0
    %760 = vmatprep.subr.mxu0 0.0
    %761 = vmatpush1.msra.mxu0 0.0
    %762 = vmatprep.subr.mxu0 0.0
    %763 = vmatpush1.msra.mxu0 0.0
    %764 = vmatprep.subr.mxu0 0.0
    %765 = vmatpush1.msra.mxu0 0.0
    %766 = vmatprep.subr.mxu0 0.0
    %767 = vmatpush1.msra.mxu0 0.0
    %768 = vmatprep.subr.mxu0 0.0
    %769 = vmatpush1.msra.mxu0 0.0
    %770 = vmatprep.subr.mxu0 0.0
    %771 = vmatpush1.msra.mxu0 0.0
    %772 = vmatprep.subr.mxu0 0.0
    %773 = vmatpush1.msra.mxu0 0.0
    %774 = vmatprep.subr.mxu0 0.0
    %775 = vmatpush1.msra.mxu0 0.0
    %776 = vmatprep.subr.mxu0 0.0
    %777 = vmatpush1.msra.mxu0 0.0
    %778 = vmatprep.subr.mxu0 0.0
    %779 = vmatpush1.msra.mxu0 0.0
    %780 = vmatprep.subr.mxu0 0.0
    %781 = vmatpush1.msra.mxu0 0.0
    %782 = vmatprep.subr.mxu0 0.0
    %783 = vmatpush1.msra.mxu0 0.0
    %784 = vmatprep.subr.mxu0 0.0
    %785 = vmatpush1.msra.mxu0 0.0
    %786 = vmatprep.mubr.f32.mxu0 0.0
    %787 = vmatmul.mubr.f32.gmra.mrb[0].mxu0 %v650
    %v788 = vpop.f32.mrb[0].mxu0
    %v789 = vadd.f32 0.0, %v788
    %v790 = vpop.f32.mrb[0].mxu0
    %791 = vdwg.mxu0
    %v792 = vadd.f32 %v129, %v718
    %v793 = vxor.u32 %v792, 2147483648
    %v794 = vmul.f32 %v793, 1.442695
    %v795 = vpow.pop %v794
    %v796 = vadd.f32 %v795, 1.0
    %v797 = vrcp.pop %v796
    %v798 = vmul.f32 1.0, %v797
    %v800 = vrot.slane %v129, 1
    %v802 = vadd.f32 %v800, %v720
    %v803 = vxor.u32 %v802, 2147483648
    %v804 = vmul.f32 %v803, 1.442695
    %v805 = vpow.pop %v804
    %v806 = vadd.f32 %v805, 1.0
    %v807 = vrcp.pop %v806
    %v808 = vmul.f32 1.0, %v807
    %v809 = vadd.f32 %v789, %v113
    %v810 = vmul.f32 %v798, %v809
    %v811 = vrot.slane %v129, 2
    %v813 = vadd.f32 %v811, %v810
    %v814 = vtanh.pop %v813
    %v815 = vsub.f32 1.0, %v808
    %v816 = vmul.f32 %v815, %v814
    %v817 = vmul.f32 %v808, %v650
    %v818 = vadd.f32 %v816, %v817
    %819 = vmatprep.subr.mxu0 %v66
    %820 = vmatpush1.msra.mxu0 %v65
    %821 = vmatprep.subr.mxu0 %v69
    %822 = vmatpush1.msra.mxu0 %v68
    %823 = vmatprep.subr.mxu0 %v72
    %824 = vmatpush1.msra.mxu0 %v71
    %825 = vmatprep.subr.mxu0 %v75
    %826 = vmatpush1.msra.mxu0 %v74
    %827 = vmatprep.subr.mxu0 %v78
    %828 = vmatpush1.msra.mxu0 %v77
    %829 = vmatprep.subr.mxu0 %v81
    %830 = vmatpush1.msra.mxu0 %v80
    %831 = vmatprep.subr.mxu0 %v84
    %832 = vmatpush1.msra.mxu0 %v83
    %833 = vmatprep.subr.mxu0 %v87
    %834 = vmatpush1.msra.mxu0 %v86
    %835 = vmatprep.subr.mxu0 %v90
    %836 = vmatpush1.msra.mxu0 %v89
    %837 = vmatprep.subr.mxu0 %v93
    %838 = vmatpush1.msra.mxu0 %v92
    %839 = vmatprep.subr.mxu0 %v96
    %840 = vmatpush1.msra.mxu0 %v95
    %841 = vmatprep.subr.mxu0 %v99
    %842 = vmatpush1.msra.mxu0 %v98
    %843 = vmatprep.subr.mxu0 %v102
    %844 = vmatpush1.msra.mxu0 %v101
    %845 = vmatprep.subr.mxu0 %v105
    %846 = vmatpush1.msra.mxu0 %v104
    %847 = vmatprep.subr.mxu0 %v108
    %848 = vmatpush1.msra.mxu0 %v107
    %849 = vmatprep.subr.mxu0 %v111
    %850 = vmatpush1.msra.mxu0 %v110
    %851 = vmatprep.subr.mxu0 0.0
    %852 = vmatpush1.msra.mxu0 0.0
    %853 = vmatprep.subr.mxu0 0.0
    %854 = vmatpush1.msra.mxu0 0.0
    %855 = vmatprep.subr.mxu0 0.0
    %856 = vmatpush1.msra.mxu0 0.0
    %857 = vmatprep.subr.mxu0 0.0
    %858 = vmatpush1.msra.mxu0 0.0
    %859 = vmatprep.subr.mxu0 0.0
    %860 = vmatpush1.msra.mxu0 0.0
    %861 = vmatprep.subr.mxu0 0.0
    %862 = vmatpush1.msra.mxu0 0.0
    %863 = vmatprep.subr.mxu0 0.0
    %864 = vmatpush1.msra.mxu0 0.0
    %865 = vmatprep.subr.mxu0 0.0
    %866 = vmatpush1.msra.mxu0 0.0
    %867 = vmatprep.subr.mxu0 0.0
    %868 = vmatpush1.msra.mxu0 0.0
    %869 = vmatprep.subr.mxu0 0.0
    %870 = vmatpush1.msra.mxu0 0.0
    %871 = vmatprep.subr.mxu0 0.0
    %872 = vmatpush1.msra.mxu0 0.0
    %873 = vmatprep.subr.mxu0 0.0
    %874 = vmatpush1.msra.mxu0 0.0
    %875 = vmatprep.subr.mxu0 0.0
    %876 = vmatpush1.msra.mxu0 0.0
    %877 = vmatprep.subr.mxu0 0.0
    %878 = vmatpush1.msra.mxu0 0.0
    %879 = vmatprep.subr.mxu0 0.0
    %880 = vmatpush1.msra.mxu0 0.0
    %881 = vmatprep.subr.mxu0 0.0
    %882 = vmatpush1.msra.mxu0 0.0
    %883 = vmatprep.mubr.f32.mxu0 0.0
    %884 = vmatmul.mubr.f32.gmra.mrb[0].mxu0 %v818
    %v885 = vpop.f32.mrb[0].mxu0
    %v886 = vadd.f32 0.0, %v885
    %v887 = vpop.f32.mrb[0].mxu0
    %v888 = vadd.f32 0.0, %v887
    %889 = vdwg.mxu0
    %890 = vmatprep.subr.mxu0 0.0
    %891 = vmatpush1.msra.mxu0 %v67
    %892 = vmatprep.subr.mxu0 0.0
    %893 = vmatpush1.msra.mxu0 %v70
    %894 = vmatprep.subr.mxu0 0.0
    %895 = vmatpush1.msra.mxu0 %v73
    %896 = vmatprep.subr.mxu0 0.0
    %897 = vmatpush1.msra.mxu0 %v76
    %898 = vmatprep.subr.mxu0 0.0
    %899 = vmatpush1.msra.mxu0 %v79
    %900 = vmatprep.subr.mxu0 0.0
    %901 = vmatpush1.msra.mxu0 %v82
    %902 = vmatprep.subr.mxu0 0.0
    %903 = vmatpush1.msra.mxu0 %v85
    %904 = vmatprep.subr.mxu0 0.0
    %905 = vmatpush1.msra.mxu0 %v88
    %906 = vmatprep.subr.mxu0 0.0
    %907 = vmatpush1.msra.mxu0 %v91
    %908 = vmatprep.subr.mxu0 0.0
    %909 = vmatpush1.msra.mxu0 %v94
    %910 = vmatprep.subr.mxu0 0.0
    %911 = vmatpush1.msra.mxu0 %v97
    %912 = vmatprep.subr.mxu0 0.0
    %913 = vmatpush1.msra.mxu0 %v100
    %914 = vmatprep.subr.mxu0 0.0
    %915 = vmatpush1.msra.mxu0 %v103
    %916 = vmatprep.subr.mxu0 0.0
    %917 = vmatpush1.msra.mxu0 %v106
    %918 = vmatprep.subr.mxu0 0.0
    %919 = vmatpush1.msra.mxu0 %v109
    %920 = vmatprep.subr.mxu0 0.0
    %921 = vmatpush1.msra.mxu0 %v112
    %922 = vmatprep.subr.mxu0 0.0
    %923 = vmatpush1.msra.mxu0 0.0
    %924 = vmatprep.subr.mxu0 0.0
    %925 = vmatpush1.msra.mxu0 0.0
    %926 = vmatprep.subr.mxu0 0.0
    %927 = vmatpush1.msra.mxu0 0.0
    %928 = vmatprep.subr.mxu0 0.0
    %929 = vmatpush1.msra.mxu0 0.0
    %930 = vmatprep.subr.mxu0 0.0
    %931 = vmatpush1.msra.mxu0 0.0
    %932 = vmatprep.subr.mxu0 0.0
    %933 = vmatpush1.msra.mxu0 0.0
    %934 = vmatprep.subr.mxu0 0.0
    %935 = vmatpush1.msra.mxu0 0.0
    %936 = vmatprep.subr.mxu0 0.0
    %937 = vmatpush1.msra.mxu0 0.0
    %938 = vmatprep.subr.mxu0 0.0
    %939 = vmatpush1.msra.mxu0 0.0
    %940 = vmatprep.subr.mxu0 0.0
    %941 = vmatpush1.msra.mxu0 0.0
    %942 = vmatprep.subr.mxu0 0.0
    %943 = vmatpush1.msra.mxu0 0.0
    %944 = vmatprep.subr.mxu0 0.0
    %945 = vmatpush1.msra.mxu0 0.0
    %946 = vmatprep.subr.mxu0 0.0
    %947 = vmatpush1.msra.mxu0 0.0
    %948 = vmatprep.subr.mxu0 0.0
    %949 = vmatpush1.msra.mxu0 0.0
    %950 = vmatprep.subr.mxu0 0.0
    %951 = vmatpush1.msra.mxu0 0.0
    %952 = vmatprep.subr.mxu0 0.0
    %953 = vmatpush1.msra.mxu0 0.0
    %954 = vmatprep.mubr.f32.mxu0 0.0
    %955 = vmatmul.mubr.f32.gmra.mrb[0].mxu0 %v818
    %v956 = vpop.f32.mrb[0].mxu0
    %v957 = vadd.f32 0.0, %v956
    %v958 = vpop.f32.mrb[0].mxu0
    %959 = vdwg.mxu0
    %v960 = vadd.f32 %v133, %v886
    %v961 = vxor.u32 %v960, 2147483648
    %v962 = vmul.f32 %v961, 1.442695
    %v963 = vpow.pop %v962
    %v964 = vadd.f32 %v963, 1.0
    %v965 = vrcp.pop %v964
    %v966 = vmul.f32 1.0, %v965
    %v968 = vrot.slane %v133, 1
    %v970 = vadd.f32 %v968, %v888
    %v971 = vxor.u32 %v970, 2147483648
    %v972 = vmul.f32 %v971, 1.442695
    %v973 = vpow.pop %v972
    %v974 = vadd.f32 %v973, 1.0
    %v975 = vrcp.pop %v974
    %v976 = vmul.f32 1.0, %v975
    %v977 = vadd.f32 %v957, %v113
    %v978 = vmul.f32 %v966, %v977
    %v979 = vrot.slane %v133, 2
    %v981 = vadd.f32 %v979, %v978
    %v982 = vtanh.pop %v981
    %v983 = vsub.f32 1.0, %v976
    %v984 = vmul.f32 %v983, %v982
    %v985 = vmul.f32 %v976, %v818
    %v986 = vadd.f32 %v984, %v985
    %987 = vmatprep.subr.mxu0 %v66
    %988 = vmatpush1.msra.mxu0 %v65
    %989 = vmatprep.subr.mxu0 %v69
    %990 = vmatpush1.msra.mxu0 %v68
    %991 = vmatprep.subr.mxu0 %v72
    %992 = vmatpush1.msra.mxu0 %v71
    %993 = vmatprep.subr.mxu0 %v75
    %994 = vmatpush1.msra.mxu0 %v74
    %995 = vmatprep.subr.mxu0 %v78
    %996 = vmatpush1.msra.mxu0 %v77
    %997 = vmatprep.subr.mxu0 %v81
    %998 = vmatpush1.msra.mxu0 %v80
    %999 = vmatprep.subr.mxu0 %v84
    %1000 = vmatpush1.msra.mxu0 %v83
    %1001 = vmatprep.subr.mxu0 %v87
    %1002 = vmatpush1.msra.mxu0 %v86
    %1003 = vmatprep.subr.mxu0 %v90
    %1004 = vmatpush1.msra.mxu0 %v89
    %1005 = vmatprep.subr.mxu0 %v93
    %1006 = vmatpush1.msra.mxu0 %v92
    %1007 = vmatprep.subr.mxu0 %v96
    %1008 = vmatpush1.msra.mxu0 %v95
    %1009 = vmatprep.subr.mxu0 %v99
    %1010 = vmatpush1.msra.mxu0 %v98
    %1011 = vmatprep.subr.mxu0 %v102
    %1012 = vmatpush1.msra.mxu0 %v101
    %1013 = vmatprep.subr.mxu0 %v105
    %1014 = vmatpush1.msra.mxu0 %v104
    %1015 = vmatprep.subr.mxu0 %v108
    %1016 = vmatpush1.msra.mxu0 %v107
    %1017 = vmatprep.subr.mxu0 %v111
    %1018 = vmatpush1.msra.mxu0 %v110
    %1019 = vmatprep.subr.mxu0 0.0
    %1020 = vmatpush1.msra.mxu0 0.0
    %1021 = vmatprep.subr.mxu0 0.0
    %1022 = vmatpush1.msra.mxu0 0.0
    %1023 = vmatprep.subr.mxu0 0.0
    %1024 = vmatpush1.msra.mxu0 0.0
    %1025 = vmatprep.subr.mxu0 0.0
    %1026 = vmatpush1.msra.mxu0 0.0
    %1027 = vmatprep.subr.mxu0 0.0
    %1028 = vmatpush1.msra.mxu0 0.0
    %1029 = vmatprep.subr.mxu0 0.0
    %1030 = vmatpush1.msra.mxu0 0.0
    %1031 = vmatprep.subr.mxu0 0.0
    %1032 = vmatpush1.msra.mxu0 0.0
    %1033 = vmatprep.subr.mxu0 0.0
    %1034 = vmatpush1.msra.mxu0 0.0
    %1035 = vmatprep.subr.mxu0 0.0
    %1036 = vmatpush1.msra.mxu0 0.0
    %1037 = vmatprep.subr.mxu0 0.0
    %1038 = vmatpush1.msra.mxu0 0.0
    %1039 = vmatprep.subr.mxu0 0.0
    %1040 = vmatpush1.msra.mxu0 0.0
    %1041 = vmatprep.subr.mxu0 0.0
    %1042 = vmatpush1.msra.mxu0 0.0
    %1043 = vmatprep.subr.mxu0 0.0
    %1044 = vmatpush1.msra.mxu0 0.0
    %1045 = vmatprep.subr.mxu0 0.0
    %1046 = vmatpush1.msra.mxu0 0.0
    %1047 = vmatprep.subr.mxu0 0.0
    %1048 = vmatpush1.msra.mxu0 0.0
    %1049 = vmatprep.subr.mxu0 0.0
    %1050 = vmatpush1.msra.mxu0 0.0
    %1051 = vmatprep.mubr.f32.mxu0 0.0
    %1052 = vmatmul.mubr.f32.gmra.mrb[0].mxu0 %v986
    %v1053 = vpop.f32.mrb[0].mxu0
    %v1054 = vadd.f32 0.0, %v1053
    %v1055 = vpop.f32.mrb[0].mxu0
    %v1056 = vadd.f32 0.0, %v1055
    %1057 = vdwg.mxu0
    %1058 = vmatprep.subr.mxu0 0.0
    %1059 = vmatpush1.msra.mxu0 %v67
    %1060 = vmatprep.subr.mxu0 0.0
    %1061 = vmatpush1.msra.mxu0 %v70
    %1062 = vmatprep.subr.mxu0 0.0
    %1063 = vmatpush1.msra.mxu0 %v73
    %1064 = vmatprep.subr.mxu0 0.0
    %1065 = vmatpush1.msra.mxu0 %v76
    %1066 = vmatprep.subr.mxu0 0.0
    %1067 = vmatpush1.msra.mxu0 %v79
    %1068 = vmatprep.subr.mxu0 0.0
    %1069 = vmatpush1.msra.mxu0 %v82
    %1070 = vmatprep.subr.mxu0 0.0
    %1071 = vmatpush1.msra.mxu0 %v85
    %1072 = vmatprep.subr.mxu0 0.0
    %1073 = vmatpush1.msra.mxu0 %v88
    %1074 = vmatprep.subr.mxu0 0.0
    %1075 = vmatpush1.msra.mxu0 %v91
    %1076 = vmatprep.subr.mxu0 0.0
    %1077 = vmatpush1.msra.mxu0 %v94
    %1078 = vmatprep.subr.mxu0 0.0
    %1079 = vmatpush1.msra.mxu0 %v97
    %1080 = vmatprep.subr.mxu0 0.0
    %1081 = vmatpush1.msra.mxu0 %v100
    %1082 = vmatprep.subr.mxu0 0.0
    %1083 = vmatpush1.msra.mxu0 %v103
    %1084 = vmatprep.subr.mxu0 0.0
    %1085 = vmatpush1.msra.mxu0 %v106
    %1086 = vmatprep.subr.mxu0 0.0
    %1087 = vmatpush1.msra.mxu0 %v109
    %1088 = vmatprep.subr.mxu0 0.0
    %1089 = vmatpush1.msra.mxu0 %v112
    %1090 = vmatprep.subr.mxu0 0.0
    %1091 = vmatpush1.msra.mxu0 0.0
    %1092 = vmatprep.subr.mxu0 0.0
    %1093 = vmatpush1.msra.mxu0 0.0
    %1094 = vmatprep.subr.mxu0 0.0
    %1095 = vmatpush1.msra.mxu0 0.0
    %1096 = vmatprep.subr.mxu0 0.0
    %1097 = vmatpush1.msra.mxu0 0.0
    %1098 = vmatprep.subr.mxu0 0.0
    %1099 = vmatpush1.msra.mxu0 0.0
    %1100 = vmatprep.subr.mxu0 0.0
    %1101 = vmatpush1.msra.mxu0 0.0
    %1102 = vmatprep.subr.mxu0 0.0
    %1103 = vmatpush1.msra.mxu0 0.0
    %1104 = vmatprep.subr.mxu0 0.0
    %1105 = vmatpush1.msra.mxu0 0.0
    %1106 = vmatprep.subr.mxu0 0.0
    %1107 = vmatpush1.msra.mxu0 0.0
    %1108 = vmatprep.subr.mxu0 0.0
    %1109 = vmatpush1.msra.mxu0 0.0
    %1110 = vmatprep.subr.mxu0 0.0
    %1111 = vmatpush1.msra.mxu0 0.0
    %1112 = vmatprep.subr.mxu0 0.0
    %1113 = vmatpush1.msra.mxu0 0.0
    %1114 = vmatprep.subr.mxu0 0.0
    %1115 = vmatpush1.msra.mxu0 0.0
    %1116 = vmatprep.subr.mxu0 0.0
    %1117 = vmatpush1.msra.mxu0 0.0
    %1118 = vmatprep.subr.mxu0 0.0
    %1119 = vmatpush1.msra.mxu0 0.0
    %1120 = vmatprep.subr.mxu0 0.0
    %1121 = vmatpush1.msra.mxu0 0.0
    %1122 = vmatprep.mubr.f32.mxu0 0.0
    %1123 = vmatmul.mubr.f32.gmra.mrb[0].mxu0 %v986
    %v1124 = vpop.f32.mrb[0].mxu0
    %v1125 = vadd.f32 0.0, %v1124
    %v1126 = vpop.f32.mrb[0].mxu0
    %1127 = vdwg.mxu0
    %v1128 = vadd.f32 %v137, %v1054
    %v1129 = vxor.u32 %v1128, 2147483648
    %v1130 = vmul.f32 %v1129, 1.442695
    %v1131 = vpow.pop %v1130
    %v1132 = vadd.f32 %v1131, 1.0
    %v1133 = vrcp.pop %v1132
    %v1134 = vmul.f32 1.0, %v1133
    %v1136 = vrot.slane %v137, 1
    %v1138 = vadd.f32 %v1136, %v1056
    %v1139 = vxor.u32 %v1138, 2147483648
    %v1140 = vmul.f32 %v1139, 1.442695
    %v1141 = vpow.pop %v1140
    %v1142 = vadd.f32 %v1141, 1.0
    %v1143 = vrcp.pop %v1142
    %v1144 = vmul.f32 1.0, %v1143
    %v1145 = vadd.f32 %v1125, %v113
    %v1146 = vmul.f32 %v1134, %v1145
    %v1147 = vrot.slane %v137, 2
    %v1149 = vadd.f32 %v1147, %v1146
    %v1150 = vtanh.pop %v1149
    %v1151 = vsub.f32 1.0, %v1144
    %v1152 = vmul.f32 %v1151, %v1150
    %v1153 = vmul.f32 %v1144, %v986
    %v1154 = vadd.f32 %v1152, %v1153
    %1155 = vmatprep.subr.mxu0 %v66
    %1156 = vmatpush1.msra.mxu0 %v65
    %1157 = vmatprep.subr.mxu0 %v69
    %1158 = vmatpush1.msra.mxu0 %v68
    %1159 = vmatprep.subr.mxu0 %v72
    %1160 = vmatpush1.msra.mxu0 %v71
    %1161 = vmatprep.subr.mxu0 %v75
    %1162 = vmatpush1.msra.mxu0 %v74
    %1163 = vmatprep.subr.mxu0 %v78
    %1164 = vmatpush1.msra.mxu0 %v77
    %1165 = vmatprep.subr.mxu0 %v81
    %1166 = vmatpush1.msra.mxu0 %v80
    %1167 = vmatprep.subr.mxu0 %v84
    %1168 = vmatpush1.msra.mxu0 %v83
    %1169 = vmatprep.subr.mxu0 %v87
    %1170 = vmatpush1.msra.mxu0 %v86
    %1171 = vmatprep.subr.mxu0 %v90
    %1172 = vmatpush1.msra.mxu0 %v89
    %1173 = vmatprep.subr.mxu0 %v93
    %1174 = vmatpush1.msra.mxu0 %v92
    %1175 = vmatprep.subr.mxu0 %v96
    %1176 = vmatpush1.msra.mxu0 %v95
    %1177 = vmatprep.subr.mxu0 %v99
    %1178 = vmatpush1.msra.mxu0 %v98
    %1179 = vmatprep.subr.mxu0 %v102
    %1180 = vmatpush1.msra.mxu0 %v101
    %1181 = vmatprep.subr.mxu0 %v105
    %1182 = vmatpush1.msra.mxu0 %v104
    %1183 = vmatprep.subr.mxu0 %v108
    %1184 = vmatpush1.msra.mxu0 %v107
    %1185 = vmatprep.subr.mxu0 %v111
    %1186 = vmatpush1.msra.mxu0 %v110
    %1187 = vmatprep.subr.mxu0 0.0
    %1188 = vmatpush1.msra.mxu0 0.0
    %1189 = vmatprep.subr.mxu0 0.0
    %1190 = vmatpush1.msra.mxu0 0.0
    %1191 = vmatprep.subr.mxu0 0.0
    %1192 = vmatpush1.msra.mxu0 0.0
    %1193 = vmatprep.subr.mxu0 0.0
    %1194 = vmatpush1.msra.mxu0 0.0
    %1195 = vmatprep.subr.mxu0 0.0
    %1196 = vmatpush1.msra.mxu0 0.0
    %1197 = vmatprep.subr.mxu0 0.0
    %1198 = vmatpush1.msra.mxu0 0.0
    %1199 = vmatprep.subr.mxu0 0.0
    %1200 = vmatpush1.msra.mxu0 0.0
    %1201 = vmatprep.subr.mxu0 0.0
    %1202 = vmatpush1.msra.mxu0 0.0
    %1203 = vmatprep.subr.mxu0 0.0
    %1204 = vmatpush1.msra.mxu0 0.0
    %1205 = vmatprep.subr.mxu0 0.0
    %1206 = vmatpush1.msra.mxu0 0.0
    %1207 = vmatprep.subr.mxu0 0.0
    %1208 = vmatpush1.msra.mxu0 0.0
    %1209 = vmatprep.subr.mxu0 0.0
    %1210 = vmatpush1.msra.mxu0 0.0
    %1211 = vmatprep.subr.mxu0 0.0
    %1212 = vmatpush1.msra.mxu0 0.0
    %1213 = vmatprep.subr.mxu0 0.0
    %1214 = vmatpush1.msra.mxu0 0.0
    %1215 = vmatprep.subr.mxu0 0.0
    %1216 = vmatpush1.msra.mxu0 0.0
    %1217 = vmatprep.subr.mxu0 0.0
    %1218 = vmatpush1.msra.mxu0 0.0
    %1219 = vmatprep.mubr.f32.mxu0 0.0
    %1220 = vmatmul.mubr.f32.gmra.mrb[0].mxu0 %v1154
    %v1221 = vpop.f32.mrb[0].mxu0
    %v1222 = vadd.f32 0.0, %v1221
    %v1223 = vpop.f32.mrb[0].mxu0
    %v1224 = vadd.f32 0.0, %v1223
    %1225 = vdwg.mxu0
    %1226 = vmatprep.subr.mxu0 0.0
    %1227 = vmatpush1.msra.mxu0 %v67
    %1228 = vmatprep.subr.mxu0 0.0
    %1229 = vmatpush1.msra.mxu0 %v70
    %1230 = vmatprep.subr.mxu0 0.0
    %1231 = vmatpush1.msra.mxu0 %v73
    %1232 = vmatprep.subr.mxu0 0.0
    %1233 = vmatpush1.msra.mxu0 %v76
    %1234 = vmatprep.subr.mxu0 0.0
    %1235 = vmatpush1.msra.mxu0 %v79
    %1236 = vmatprep.subr.mxu0 0.0
    %1237 = vmatpush1.msra.mxu0 %v82
    %1238 = vmatprep.subr.mxu0 0.0
    %1239 = vmatpush1.msra.mxu0 %v85
    %1240 = vmatprep.subr.mxu0 0.0
    %1241 = vmatpush1.msra.mxu0 %v88
    %1242 = vmatprep.subr.mxu0 0.0
    %1243 = vmatpush1.msra.mxu0 %v91
    %1244 = vmatprep.subr.mxu0 0.0
    %1245 = vmatpush1.msra.mxu0 %v94
    %1246 = vmatprep.subr.mxu0 0.0
    %1247 = vmatpush1.msra.mxu0 %v97
    %1248 = vmatprep.subr.mxu0 0.0
    %1249 = vmatpush1.msra.mxu0 %v100
    %1250 = vmatprep.subr.mxu0 0.0
    %1251 = vmatpush1.msra.mxu0 %v103
    %1252 = vmatprep.subr.mxu0 0.0
    %1253 = vmatpush1.msra.mxu0 %v106
    %1254 = vmatprep.subr.mxu0 0.0
    %1255 = vmatpush1.msra.mxu0 %v109
    %1256 = vmatprep.subr.mxu0 0.0
    %1257 = vmatpush1.msra.mxu0 %v112
    %1258 = vmatprep.subr.mxu0 0.0
    %1259 = vmatpush1.msra.mxu0 0.0
    %1260 = vmatprep.subr.mxu0 0.0
    %1261 = vmatpush1.msra.mxu0 0.0
    %1262 = vmatprep.subr.mxu0 0.0
    %1263 = vmatpush1.msra.mxu0 0.0
    %1264 = vmatprep.subr.mxu0 0.0
    %1265 = vmatpush1.msra.mxu0 0.0
    %1266 = vmatprep.subr.mxu0 0.0
    %1267 = vmatpush1.msra.mxu0 0.0
    %1268 = vmatprep.subr.mxu0 0.0
    %1269 = vmatpush1.msra.mxu0 0.0
    %1270 = vmatprep.subr.mxu0 0.0
    %1271 = vmatpush1.msra.mxu0 0.0
    %1272 = vmatprep.subr.mxu0 0.0
    %1273 = vmatpush1.msra.mxu0 0.0
    %1274 = vmatprep.subr.mxu0 0.0
    %1275 = vmatpush1.msra.mxu0 0.0
    %1276 = vmatprep.subr.mxu0 0.0
    %1277 = vmatpush1.msra.mxu0 0.0
    %1278 = vmatprep.subr.mxu0 0.0
    %1279 = vmatpush1.msra.mxu0 0.0
    %1280 = vmatprep.subr.mxu0 0.0
    %1281 = vmatpush1.msra.mxu0 0.0
    %1282 = vmatprep.subr.mxu0 0.0
    %1283 = vmatpush1.msra.mxu0 0.0
    %1284 = vmatprep.subr.mxu0 0.0
    %1285 = vmatpush1.msra.mxu0 0.0
    %1286 = vmatprep.subr.mxu0 0.0
    %1287 = vmatpush1.msra.mxu0 0.0
    %1288 = vmatprep.subr.mxu0 0.0
    %1289 = vmatpush1.msra.mxu0 0.0
    %1290 = vmatprep.mubr.f32.mxu0 0.0
    %1291 = vmatmul.mubr.f32.gmra.mrb[0].mxu0 %v1154
    %v1292 = vpop.f32.mrb[0].mxu0
    %v1293 = vadd.f32 0.0, %v1292
    %v1294 = vpop.f32.mrb[0].mxu0
    %1295 = vdwg.mxu0
    %v1296 = vadd.f32 %v141, %v1222
    %v1297 = vxor.u32 %v1296, 2147483648
    %v1298 = vmul.f32 %v1297, 1.442695
    %v1299 = vpow.pop %v1298
    %v1300 = vadd.f32 %v1299, 1.0
    %v1301 = vrcp.pop %v1300
    %v1302 = vmul.f32 1.0, %v1301
    %v1304 = vrot.slane %v141, 1
    %v1306 = vadd.f32 %v1304, %v1224
    %v1307 = vxor.u32 %v1306, 2147483648
    %v1308 = vmul.f32 %v1307, 1.442695
    %v1309 = vpow.pop %v1308
    %v1310 = vadd.f32 %v1309, 1.0
    %v1311 = vrcp.pop %v1310
    %v1312 = vmul.f32 1.0, %v1311
    %v1313 = vadd.f32 %v1293, %v113
    %v1314 = vmul.f32 %v1302, %v1313
    %v1315 = vrot.slane %v141, 2
    %v1317 = vadd.f32 %v1315, %v1314
    %v1318 = vtanh.pop %v1317
    %v1319 = vsub.f32 1.0, %v1312
    %v1320 = vmul.f32 %v1319, %v1318
    %v1321 = vmul.f32 %v1312, %v1154
    %v1322 = vadd.f32 %v1320, %v1321
    %1323 = vmatprep.subr.mxu0 %v66
    %1324 = vmatpush1.msra.mxu0 %v65
    %1325 = vmatprep.subr.mxu0 %v69
    %1326 = vmatpush1.msra.mxu0 %v68
    %1327 = vmatprep.subr.mxu0 %v72
    %1328 = vmatpush1.msra.mxu0 %v71
    %1329 = vmatprep.subr.mxu0 %v75
    %1330 = vmatpush1.msra.mxu0 %v74
    %1331 = vmatprep.subr.mxu0 %v78
    %1332 = vmatpush1.msra.mxu0 %v77
    %1333 = vmatprep.subr.mxu0 %v81
    %1334 = vmatpush1.msra.mxu0 %v80
    %1335 = vmatprep.subr.mxu0 %v84
    %1336 = vmatpush1.msra.mxu0 %v83
    %1337 = vmatprep.subr.mxu0 %v87
    %1338 = vmatpush1.msra.mxu0 %v86
    %1339 = vmatprep.subr.mxu0 %v90
    %1340 = vmatpush1.msra.mxu0 %v89
    %1341 = vmatprep.subr.mxu0 %v93
    %1342 = vmatpush1.msra.mxu0 %v92
    %1343 = vmatprep.subr.mxu0 %v96
    %1344 = vmatpush1.msra.mxu0 %v95
    %1345 = vmatprep.subr.mxu0 %v99
    %1346 = vmatpush1.msra.mxu0 %v98
    %1347 = vmatprep.subr.mxu0 %v102
    %1348 = vmatpush1.msra.mxu0 %v101
    %1349 = vmatprep.subr.mxu0 %v105
    %1350 = vmatpush1.msra.mxu0 %v104
    %1351 = vmatprep.subr.mxu0 %v108
    %1352 = vmatpush1.msra.mxu0 %v107
    %1353 = vmatprep.subr.mxu0 %v111
    %1354 = vmatpush1.msra.mxu0 %v110
    %1355 = vmatprep.subr.mxu0 0.0
    %1356 = vmatpush1.msra.mxu0 0.0
    %1357 = vmatprep.subr.mxu0 0.0
    %1358 = vmatpush1.msra.mxu0 0.0
    %1359 = vmatprep.subr.mxu0 0.0
    %1360 = vmatpush1.msra.mxu0 0.0
    %1361 = vmatprep.subr.mxu0 0.0
    %1362 = vmatpush1.msra.mxu0 0.0
    %1363 = vmatprep.subr.mxu0 0.0
    %1364 = vmatpush1.msra.mxu0 0.0
    %1365 = vmatprep.subr.mxu0 0.0
    %1366 = vmatpush1.msra.mxu0 0.0
    %1367 = vmatprep.subr.mxu0 0.0
    %1368 = vmatpush1.msra.mxu0 0.0
    %1369 = vmatprep.subr.mxu0 0.0
    %1370 = vmatpush1.msra.mxu0 0.0
    %1371 = vmatprep.subr.mxu0 0.0
    %1372 = vmatpush1.msra.mxu0 0.0
    %1373 = vmatprep.subr.mxu0 0.0
    %1374 = vmatpush1.msra.mxu0 0.0
    %1375 = vmatprep.subr.mxu0 0.0
    %1376 = vmatpush1.msra.mxu0 0.0
    %1377 = vmatprep.subr.mxu0 0.0
    %1378 = vmatpush1.msra.mxu0 0.0
    %1379 = vmatprep.subr.mxu0 0.0
    %1380 = vmatpush1.msra.mxu0 0.0
    %1381 = vmatprep.subr.mxu0 0.0
    %1382 = vmatpush1.msra.mxu0 0.0
    %1383 = vmatprep.subr.mxu0 0.0
    %1384 = vmatpush1.msra.mxu0 0.0
    %1385 = vmatprep.subr.mxu0 0.0
    %1386 = vmatpush1.msra.mxu0 0.0
    %1387 = vmatprep.mubr.f32.mxu0 0.0
    %1388 = vmatmul.mubr.f32.gmra.mrb[0].mxu0 %v1322
    %v1389 = vpop.f32.mrb[0].mxu0
    %v1390 = vadd.f32 0.0, %v1389
    %v1391 = vpop.f32.mrb[0].mxu0
    %v1392 = vadd.f32 0.0, %v1391
    %1393 = vdwg.mxu0
    %1394 = vmatprep.subr.mxu0 0.0
    %1395 = vmatpush1.msra.mxu0 %v67
    %1396 = vmatprep.subr.mxu0 0.0
    %1397 = vmatpush1.msra.mxu0 %v70
    %1398 = vmatprep.subr.mxu0 0.0
    %1399 = vmatpush1.msra.mxu0 %v73
    %1400 = vmatprep.subr.mxu0 0.0
    %1401 = vmatpush1.msra.mxu0 %v76
    %1402 = vmatprep.subr.mxu0 0.0
    %1403 = vmatpush1.msra.mxu0 %v79
    %1404 = vmatprep.subr.mxu0 0.0
    %1405 = vmatpush1.msra.mxu0 %v82
    %1406 = vmatprep.subr.mxu0 0.0
    %1407 = vmatpush1.msra.mxu0 %v85
    %1408 = vmatprep.subr.mxu0 0.0
    %1409 = vmatpush1.msra.mxu0 %v88
    %1410 = vmatprep.subr.mxu0 0.0
    %1411 = vmatpush1.msra.mxu0 %v91
    %1412 = vmatprep.subr.mxu0 0.0
    %1413 = vmatpush1.msra.mxu0 %v94
    %1414 = vmatprep.subr.mxu0 0.0
    %1415 = vmatpush1.msra.mxu0 %v97
    %1416 = vmatprep.subr.mxu0 0.0
    %1417 = vmatpush1.msra.mxu0 %v100
    %1418 = vmatprep.subr.mxu0 0.0
    %1419 = vmatpush1.msra.mxu0 %v103
    %1420 = vmatprep.subr.mxu0 0.0
    %1421 = vmatpush1.msra.mxu0 %v106
    %1422 = vmatprep.subr.mxu0 0.0
    %1423 = vmatpush1.msra.mxu0 %v109
    %1424 = vmatprep.subr.mxu0 0.0
    %1425 = vmatpush1.msra.mxu0 %v112
    %1426 = vmatprep.subr.mxu0 0.0
    %1427 = vmatpush1.msra.mxu0 0.0
    %1428 = vmatprep.subr.mxu0 0.0
    %1429 = vmatpush1.msra.mxu0 0.0
    %1430 = vmatprep.subr.mxu0 0.0
    %1431 = vmatpush1.msra.mxu0 0.0
    %1432 = vmatprep.subr.mxu0 0.0
    %1433 = vmatpush1.msra.mxu0 0.0
    %1434 = vmatprep.subr.mxu0 0.0
    %1435 = vmatpush1.msra.mxu0 0.0
    %1436 = vmatprep.subr.mxu0 0.0
    %1437 = vmatpush1.msra.mxu0 0.0
    %1438 = vmatprep.subr.mxu0 0.0
    %1439 = vmatpush1.msra.mxu0 0.0
    %1440 = vmatprep.subr.mxu0 0.0
    %1441 = vmatpush1.msra.mxu0 0.0
    %1442 = vmatprep.subr.mxu0 0.0
    %1443 = vmatpush1.msra.mxu0 0.0
    %1444 = vmatprep.subr.mxu0 0.0
    %1445 = vmatpush1.msra.mxu0 0.0
    %1446 = vmatprep.subr.mxu0 0.0
    %1447 = vmatpush1.msra.mxu0 0.0
    %1448 = vmatprep.subr.mxu0 0.0
    %1449 = vmatpush1.msra.mxu0 0.0
    %1450 = vmatprep.subr.mxu0 0.0
    %1451 = vmatpush1.msra.mxu0 0.0
    %1452 = vmatprep.subr.mxu0 0.0
    %1453 = vmatpush1.msra.mxu0 0.0
    %1454 = vmatprep.subr.mxu0 0.0
    %1455 = vmatpush1.msra.mxu0 0.0
    %1456 = vmatprep.subr.mxu0 0.0
    %1457 = vmatpush1.msra.mxu0 0.0
    %1458 = vmatprep.mubr.f32.mxu0 0.0
    %1459 = vmatmul.mubr.f32.gmra.mrb[0].mxu0 %v1322
    %v1460 = vpop.f32.mrb[0].mxu0
    %v1461 = vadd.f32 0.0, %v1460
    %v1462 = vpop.f32.mrb[0].mxu0
    %1463 = vdwg.mxu0
    %v1464 = vadd.f32 %v145, %v1390
    %v1465 = vxor.u32 %v1464, 2147483648
    %v1466 = vmul.f32 %v1465, 1.442695
    %v1467 = vpow.pop %v1466
    %v1468 = vadd.f32 %v1467, 1.0
    %v1469 = vrcp.pop %v1468
    %v1470 = vmul.f32 1.0, %v1469
    %v1472 = vrot.slane %v145, 1
    %v1474 = vadd.f32 %v1472, %v1392
    %v1475 = vxor.u32 %v1474, 2147483648
    %v1476 = vmul.f32 %v1475, 1.442695
    %v1477 = vpow.pop %v1476
    %v1478 = vadd.f32 %v1477, 1.0
    %v1479 = vrcp.pop %v1478
    %v1480 = vmul.f32 1.0, %v1479
    %v1481 = vadd.f32 %v1461, %v113
    %v1482 = vmul.f32 %v1470, %v1481
    %v1483 = vrot.slane %v145, 2
    %v1485 = vadd.f32 %v1483, %v1482
    %v1486 = vtanh.pop %v1485
    %v1487 = vsub.f32 1.0, %v1480
    %v1488 = vmul.f32 %v1487, %v1486
    %v1489 = vmul.f32 %v1480, %v1322
    %v1490 = vadd.f32 %v1488, %v1489
    %v1492 = vlaneseq
    %v1493 = vshrl.u32 %v1492, 7
    %v1494 = vsub.s32 0, %v1493
    %v1495 = vrot.slane %v482, %v1494
    %v1498 = vlaneseq
    %v1499 = vshrl.u32 %v1498, 7
    %v1500 = vsub.s32 0, %v1499
    %v1501 = vrot.slane %v650, %v1500
    %v1504 = vlaneseq
    %v1505 = vshrl.u32 %v1504, 7
    %v1506 = vsub.s32 0, %v1505
    %v1507 = vrot.slane %v818, %v1506
    %v1510 = vlaneseq
    %v1511 = vshrl.u32 %v1510, 7
    %v1512 = vsub.s32 0, %v1511
    %v1513 = vrot.slane %v986, %v1512
    %v1516 = vlaneseq
    %v1517 = vshrl.u32 %v1516, 7
    %v1518 = vsub.s32 0, %v1517
    %v1519 = vrot.slane %v1154, %v1518
    %v1522 = vlaneseq
    %v1523 = vshrl.u32 %v1522, 7
    %v1524 = vsub.s32 0, %v1523
    %v1525 = vrot.slane %v1322, %v1524
    %v1528 = vlaneseq
    %v1529 = vshrl.u32 %v1528, 7
    %v1530 = vsub.s32 0, %v1529
    %v1531 = vrot.slane %v1490, %v1530
    %vm1533 = vcmask 1040384
    %v1534 = vsel %vm1533, %v314, %v1495
    %vm1535 = vcmask 1041408
    %v1536 = vsel %vm1535, %v1534, %v1501
    %vm1537 = vcmask 1042432
    %v1538 = vsel %vm1537, %v1536, %v1507
    %vm1539 = vcmask 1043456
    %v1540 = vsel %vm1539, %v1538, %v1513
    %vm1541 = vcmask 1044480
    %v1542 = vsel %vm1541, %v1540, %v1519
    %vm1543 = vcmask 1045504
    %v1544 = vsel %vm1543, %v1542, %v1525
    %vm1545 = vcmask 1046528
    %v1546 = vsel %vm1545, %v1544, %v1531
    %vm1547 = vcmask 261120
    %1548 = vst.msk [vmem:[#allocation9] sm:$0xff] %vm1547, %v1546
    %vm1549 = vcmask 253952
    %1550 = vst.msk [vmem:[#allocation10] sm:$0x1] %vm1549, %v1490
    // Predicated region
    $region34: #{_encoder_forward_sequence_jit.1} parent=1 // pred_check
      _
    $region35: #{_encoder_forward_sequence_jit.1} parent=1 // pred_check_branch
      %1552 = sbr.rel (0) target = $region37
    $region36: #{_encoder_forward_sequence_jit.1} parent=1 // pred_region
      %s1554 = ssub.s32 128, 128
      %1555 = vsyncadd [#allocation4], %s1554
      %s1557 = sshll.u32 [#allocation9], 4
      %s1558 = int_to_ptr.vmem [resolvable:$true] %s1557
      %1560 = dma.vmem_to_hbm [thread:$0]  %s1558, 128, %s5, [#allocation4]
    $region37: #{_encoder_forward_sequence_jit.1} parent=1 // pred_fallthru
      _
    // Predicated region
    $region38: #{_encoder_forward_sequence_jit.1} parent=1 // pred_check
      _
    $region39: #{_encoder_forward_sequence_jit.1} parent=1 // pred_check_branch
      %1562 = sbr.rel (0) target = $region41
    $region40: #{_encoder_forward_sequence_jit.1} parent=1 // pred_region
      %s1564 = ssub.s32 16, 16
      %1565 = vsyncadd [#allocation11], %s1564
      %s1567 = sshll.u32 [#allocation10], 4
      %s1568 = int_to_ptr.vmem [resolvable:$true] %s1567
      %1570 = dma.vmem_to_hbm [thread:$0]  %s1568, 16, %s6, [#allocation11]
    $region41: #{_encoder_forward_sequence_jit.1} parent=1 // pred_fallthru
      _
    // Predicated region
    $region42: #{_encoder_forward_sequence_jit.1} parent=1 // pred_check
      _
    $region43: #{_encoder_forward_sequence_jit.1} parent=1 // pred_check_branch
      %1572 = sbr.rel (0) target = $region45
    $region44: #{_encoder_forward_sequence_jit.1} parent=1 // pred_region
      %1573 = dma.done [#allocation4], 128
    $region45: #{_encoder_forward_sequence_jit.1} parent=1 // pred_fallthru
      _
    // Predicated region
    $region46: #{_encoder_forward_sequence_jit.1} parent=1 // pred_check
      _
    $region47: #{_encoder_forward_sequence_jit.1} parent=1 // pred_check_branch
      %1575 = sbr.rel (0) target = $region49
    $region48: #{_encoder_forward_sequence_jit.1} parent=1 // pred_region
      %1576 = dma.done [#allocation11], 16
    $region49: #{_encoder_forward_sequence_jit.1} parent=1 // pred_fallthru
      _
    %1577 = vsyncpa [#allocation3], 1
    %1578 = vsyncpa [#allocation8], 1
    %1579 = vsyncpa [#allocation4], 1
    %1580 = vsyncpa [#allocation11], 1
    %1581 = vsyncpa [#allocation5], 1

</llo_original>
